<compile_context>
chip_gen: v5e
topology: v5e:2x2
jax: 0.10.0
libtpu: 0.0.40
codegen_flags: <defaults>
</compile_context>

<pallas_src>
import jax
import jax.numpy as jnp
from jax import lax
from jax.experimental import pallas as pl
from jax.experimental.pallas import tpu as pltpu

LN_EPS = 1e-5  # torch.nn.LayerNorm default


def _layernorm(x, gamma, beta):
    mean = jnp.mean(x, axis=-1, keepdims=True)
    xc = x - mean
    var = jnp.mean(xc * xc, axis=-1, keepdims=True)
    return xc * lax.rsqrt(var + LN_EPS) * gamma + beta


def _silu(x):
    return x * jax.nn.sigmoid(x)


def update_kernel(
    v_ref, s_ref,                       # (3, TN, F) f32, (TN, F) f32
    wvu_ref,                            # (F, 2F) bf16 : [Wv | Wu]
    w1a_ref, w1b_ref, b1_ref, g1_ref, be1_ref,   # MLP layer 1 (split W1)
    w2_ref, b2_ref, g2_ref, be2_ref,             # MLP layer 2
    w3g_ref, w3s_ref, w3a_ref, b3g_ref, b3s_ref, b3a_ref,   # MLP layer 3 split
    v_out_ref, s_out_ref,               # outputs: (3, TN, F), (TN, F)
):
    v_all = v_ref[...]                  # single load, reused for matmul + residual
    s = s_ref[...]
    tn, F = s.shape

    # --- fused equivariant linears: one MXU matmul (3*TN, F) @ (F, 2F) ------
    v_flat = v_all.reshape(3 * tn, F).astype(jnp.bfloat16)
    vvuv = jnp.dot(v_flat, wvu_ref[...],
                   preferred_element_type=jnp.float32)      # (3*TN, 2F) f32

    vv_c = [vvuv[c * tn:(c + 1) * tn, :F] for c in range(3)]   # static slices
    uv_c = [vvuv[c * tn:(c + 1) * tn, F:] for c in range(3)]

    # squared norm over the spatial axis (reused directly for ds, no norm**2)
    vv_sq = vv_c[0] * vv_c[0] + vv_c[1] * vv_c[1] + vv_c[2] * vv_c[2]
    vv_norm = jnp.sqrt(vv_sq)

    # --- MLP: Linear -> LN -> SiLU -> Linear -> LN -> SiLU -> Linear --------
    # concat([vv_norm, s]) @ W1  ==  vv_norm @ W1a + s @ W1b   (no concat copy)
    h = (jnp.dot(vv_norm.astype(jnp.bfloat16), w1a_ref[...],
                 preferred_element_type=jnp.float32)
         + jnp.dot(s.astype(jnp.bfloat16), w1b_ref[...],
                   preferred_element_type=jnp.float32)
         + b1_ref[...])
    h = _silu(_layernorm(h, g1_ref[...], be1_ref[...]))

    h = jnp.dot(h.astype(jnp.bfloat16), w2_ref[...],
                preferred_element_type=jnp.float32) + b2_ref[...]
    h = _silu(_layernorm(h, g2_ref[...], be2_ref[...]))
    h_bf = h.astype(jnp.bfloat16)

    gates = jnp.dot(h_bf, w3g_ref[...],
                    preferred_element_type=jnp.float32) + b3g_ref[...]
    scale = jnp.dot(h_bf, w3s_ref[...],
                    preferred_element_type=jnp.float32) + b3s_ref[...]
    add_i = jnp.dot(h_bf, w3a_ref[...],
                    preferred_element_type=jnp.float32) + b3a_ref[...]

    # --- outputs -------------------------------------------------------------
    s_out_ref[...] = (s + vv_sq * scale + add_i).astype(s_out_ref.dtype)
    for c in range(3):
        v_out_ref[c] = (v_all[c] + uv_c[c] * gates).astype(v_out_ref.dtype)


def _round_up(x, m):
    return (x + m - 1) // m * m


def _const_spec(arr):
    nd = arr.ndim
    return pl.BlockSpec(arr.shape, lambda i, _nd=nd: (0,) * _nd)


def update_forward(v_cnf, s, params, *, tile_n=256):
    """PaiNN Update forward.

    v_cnf : (3, N, F) equivariant node features (spatial-component major).
    s     : (N, F)    invariant node features.
    Returns (v_out, s_out) in the same layouts.
    """
    N, F = s.shape
    assert v_cnf.shape == (3, N, F)

    # ---- weight prep (done outside the kernel, cast matmul operands to bf16)
    wvu = jnp.concatenate([params["wv"], params["wu"]], axis=1).astype(jnp.bfloat16)
    w1a = params["w1"][:F, :].astype(jnp.bfloat16)
    w1b = params["w1"][F:, :].astype(jnp.bfloat16)
    w2 = params["w2"].astype(jnp.bfloat16)
    w3g = params["w3"][:, :F].astype(jnp.bfloat16)
    w3s = params["w3"][:, F:2 * F].astype(jnp.bfloat16)
    w3a = params["w3"][:, 2 * F:].astype(jnp.bfloat16)
    b3g = params["b3"][:, :F]
    b3s = params["b3"][:, F:2 * F]
    b3a = params["b3"][:, 2 * F:]

    # ---- node tiling (auto-pipelined, megacore-parallel) --------------------
    tn = min(tile_n, _round_up(N, 8))
    n_pad = _round_up(N, tn)
    if n_pad != N:
        v_in = jnp.pad(v_cnf, ((0, 0), (0, n_pad - N), (0, 0)))
        s_in = jnp.pad(s, ((0, n_pad - N), (0, 0)))
    else:
        v_in, s_in = v_cnf, s
    grid = (n_pad // tn,)

    weights = (wvu,
               w1a, w1b, params["b1"], params["g1"], params["be1"],
               w2, params["b2"], params["g2"], params["be2"],
               w3g, w3s, w3a, b3g, b3s, b3a)

    in_specs = (
        [pl.BlockSpec((3, tn, F), lambda i: (0, i, 0)),
         pl.BlockSpec((tn, F), lambda i: (i, 0))]
        + [_const_spec(w) for w in weights]          # weights stay VMEM-resident
    )
    out_specs = (
        pl.BlockSpec((3, tn, F), lambda i: (0, i, 0)),
        pl.BlockSpec((tn, F), lambda i: (i, 0)),
    )
    out_shapes = (
        jax.ShapeDtypeStruct((3, n_pad, F), v_cnf.dtype),
        jax.ShapeDtypeStruct((n_pad, F), s.dtype),
    )

    v_out, s_out = pl.pallas_call(
        update_kernel,
        out_shape=out_shapes,
        grid=grid,
        in_specs=in_specs,
        out_specs=out_specs,
        compiler_params=pltpu.CompilerParams(
            dimension_semantics=("parallel",),
            vmem_limit_bytes=32 * 1024 * 1024),
    )(v_in, s_in, *weights)

    if n_pad != N:
        v_out = v_out[:, :N, :]
        s_out = s_out[:N, :]
    return v_out, s_out


# --- pure-JAX f32 reference (mirrors the PyTorch forward) -------------------
def reference_update(v_cnf, s, p):
    vv = jnp.einsum("cnf,fo->cno", v_cnf, p["wv"])
    uv = jnp.einsum("cnf,fo->cno", v_cnf, p["wu"])
    vv_norm = jnp.sqrt(jnp.sum(vv * vv, axis=0))          # (N, F)
    vv_squared_norm = vv_norm ** 2
    x = jnp.concatenate([vv_norm, s], axis=-1)
    h = x @ p["w1"] + p["b1"]
    h = _silu(_layernorm(h, p["g1"], p["be1"]))
    h = h @ p["w2"] + p["b2"]
    h = _silu(_layernorm(h, p["g2"], p["be2"]))
    out = h @ p["w3"] + p["b3"]
    F = s.shape[-1]
    gates, scale, addi = out[:, :F], out[:, F:2 * F], out[:, 2 * F:]
    dv = uv * gates[None, :, :]
    ds = vv_squared_norm * scale + addi
    return v_cnf + dv, s + ds


def make_params(key, n_features):
    F = n_features
    ks = jax.random.split(key, 8)
    scale = 0.05
    return {
        # EquivariantLinear weights, stored as (in, out); no bias (bias=False).
        "wu": scale * jax.random.normal(ks[0], (F, F), jnp.float32),
        "wv": scale * jax.random.normal(ks[1], (F, F), jnp.float32),
        # MLP: Linear(2F,F) -> LN(F) -> SiLU -> Linear(F,F) -> LN(F) -> SiLU -> Linear(F,3F)
        "w1": scale * jax.random.normal(ks[2], (2 * F, F), jnp.float32),
        "b1": scale * jax.random.normal(ks[3], (1, F), jnp.float32),
        "g1": jnp.ones((1, F), jnp.float32),
        "be1": jnp.zeros((1, F), jnp.float32),
        "w2": scale * jax.random.normal(ks[4], (F, F), jnp.float32),
        "b2": scale * jax.random.normal(ks[5], (1, F), jnp.float32),
        "g2": jnp.ones((1, F), jnp.float32),
        "be2": jnp.zeros((1, F), jnp.float32),
        "w3": scale * jax.random.normal(ks[6], (F, 3 * F), jnp.float32),
        "b3": scale * jax.random.normal(ks[7], (1, 3 * F), jnp.float32),
    }


if __name__ == "__main__":
    N_NODES = 16        # number of graph nodes (small demo)
    N_FEATURES = 128    # module default n_features

    key = jax.random.PRNGKey(0)
    kv, ks, kp = jax.random.split(key, 3)

    # equivariant features kept in the TPU-friendly (3, N, F) layout end-to-end
    v = jax.random.normal(kv, (3, N_NODES, N_FEATURES), jnp.float32)
    s = jax.random.normal(ks, (N_NODES, N_FEATURES), jnp.float32)
    params = make_params(kp, N_FEATURES)

    v_out, s_out = update_forward(v, s, params)
    jax.block_until_ready((v_out, s_out))

    v_ref, s_ref = reference_update(v, s, params)
    assert v_out.shape == v.shape and s_out.shape == s.shape
    # bf16 matmul operands vs f32 reference -> slightly relaxed tolerance
    assert jnp.allclose(v_out, v_ref, rtol=5e-2, atol=5e-2), (
        float(jnp.max(jnp.abs(v_out - v_ref))))
    assert jnp.allclose(s_out, s_ref, rtol=5e-2, atol=5e-2), (
        float(jnp.max(jnp.abs(s_out - s_ref))))

    print("KERNEL_OK")
</pallas_src>

<mosaic_0001>
module attributes {stable_mosaic.version = 11 : i64} {
  func.func @update_kernel(%arg0: i32, %arg1: memref<3x16x128xf32, #tpu.memory_space<vmem>>, %arg2: memref<16x128xf32, #tpu.memory_space<vmem>>, %arg3: memref<128x256xbf16, #tpu.memory_space<vmem>>, %arg4: memref<128x128xbf16, #tpu.memory_space<vmem>>, %arg5: memref<128x128xbf16, #tpu.memory_space<vmem>>, %arg6: memref<1x128xf32, #tpu.memory_space<vmem>>, %arg7: memref<1x128xf32, #tpu.memory_space<vmem>>, %arg8: memref<1x128xf32, #tpu.memory_space<vmem>>, %arg9: memref<128x128xbf16, #tpu.memory_space<vmem>>, %arg10: memref<1x128xf32, #tpu.memory_space<vmem>>, %arg11: memref<1x128xf32, #tpu.memory_space<vmem>>, %arg12: memref<1x128xf32, #tpu.memory_space<vmem>>, %arg13: memref<128x128xbf16, #tpu.memory_space<vmem>>, %arg14: memref<128x128xbf16, #tpu.memory_space<vmem>>, %arg15: memref<128x128xbf16, #tpu.memory_space<vmem>>, %arg16: memref<1x128xf32, #tpu.memory_space<vmem>>, %arg17: memref<1x128xf32, #tpu.memory_space<vmem>>, %arg18: memref<1x128xf32, #tpu.memory_space<vmem>>, %arg19: memref<3x16x128xf32, #tpu.memory_space<vmem>>, %arg20: memref<16x128xf32, #tpu.memory_space<vmem>>) attributes {dimension_semantics = [#tpu.dimension_semantics<parallel>], iteration_bounds = array<i64: 1>, scalar_prefetch = 0 : i64, scratch_operands = 0 : i64, tpu.core_type = #tpu.core_type<tc>, window_params = [{transform_indices = @transform_0, window_bounds = array<i64: 3, 16, 128>}, {transform_indices = @transform_1, window_bounds = array<i64: 16, 128>}, {pipeline_mode = #tpu.pipeline_mode<synchronous>, transform_indices = @transform_2, window_bounds = array<i64: 128, 256>}, {pipeline_mode = #tpu.pipeline_mode<synchronous>, transform_indices = @transform_3, window_bounds = array<i64: 128, 128>}, {pipeline_mode = #tpu.pipeline_mode<synchronous>, transform_indices = @transform_4, window_bounds = array<i64: 128, 128>}, {pipeline_mode = #tpu.pipeline_mode<synchronous>, transform_indices = @transform_5, window_bounds = array<i64: 1, 128>}, {pipeline_mode = #tpu.pipeline_mode<synchronous>, transform_indices = @transform_6, window_bounds = array<i64: 1, 128>}, {pipeline_mode = #tpu.pipeline_mode<synchronous>, transform_indices = @transform_7, window_bounds = array<i64: 1, 128>}, {pipeline_mode = #tpu.pipeline_mode<synchronous>, transform_indices = @transform_8, window_bounds = array<i64: 128, 128>}, {pipeline_mode = #tpu.pipeline_mode<synchronous>, transform_indices = @transform_9, window_bounds = array<i64: 1, 128>}, {pipeline_mode = #tpu.pipeline_mode<synchronous>, transform_indices = @transform_10, window_bounds = array<i64: 1, 128>}, {pipeline_mode = #tpu.pipeline_mode<synchronous>, transform_indices = @transform_11, window_bounds = array<i64: 1, 128>}, {pipeline_mode = #tpu.pipeline_mode<synchronous>, transform_indices = @transform_12, window_bounds = array<i64: 128, 128>}, {pipeline_mode = #tpu.pipeline_mode<synchronous>, transform_indices = @transform_13, window_bounds = array<i64: 128, 128>}, {pipeline_mode = #tpu.pipeline_mode<synchronous>, transform_indices = @transform_14, window_bounds = array<i64: 128, 128>}, {pipeline_mode = #tpu.pipeline_mode<synchronous>, transform_indices = @transform_15, window_bounds = array<i64: 1, 128>}, {pipeline_mode = #tpu.pipeline_mode<synchronous>, transform_indices = @transform_16, window_bounds = array<i64: 1, 128>}, {pipeline_mode = #tpu.pipeline_mode<synchronous>, transform_indices = @transform_17, window_bounds = array<i64: 1, 128>}, {transform_indices = @transform_18, window_bounds = array<i64: 3, 16, 128>}, {transform_indices = @transform_19, window_bounds = array<i64: 16, 128>}]} {
    %c0 = arith.constant 0 : index
    %c0_0 = arith.constant 0 : index
    %c0_1 = arith.constant 0 : index
    %0 = vector.load %arg1[%c0, %c0_0, %c0_1] : memref<3x16x128xf32, #tpu.memory_space<vmem>>, vector<3x16x128xf32>
    %c0_2 = arith.constant 0 : index
    %c0_3 = arith.constant 0 : index
    %1 = vector.load %arg2[%c0_2, %c0_3] : memref<16x128xf32, #tpu.memory_space<vmem>>, vector<16x128xf32>
    %2 = vector.shape_cast %0 : vector<3x16x128xf32> to vector<48x128xf32>
    %3 = arith.truncf %2 : vector<48x128xf32> to vector<48x128xbf16>
    %c0_4 = arith.constant 0 : index
    %c0_5 = arith.constant 0 : index
    %4 = vector.load %arg3[%c0_4, %c0_5] : memref<128x256xbf16, #tpu.memory_space<vmem>>, vector<128x256xbf16>
    %cst = arith.constant dense<0.000000e+00> : vector<48x256xf32>
    %5 = tpu.matmul %3, %4, %cst {dimension_numbers = #tpu.dot_dimension_numbers<[1], [0], [0], [1], [0, 0, 1, 1], [], []>} : vector<48x128xbf16>, vector<128x256xbf16>, vector<48x256xf32> -> vector<48x256xf32>
    %6 = vector.extract_strided_slice %5 {offsets = [0, 0], sizes = [16, 128], strides = [1, 1]} : vector<48x256xf32> to vector<16x128xf32>
    %7 = vector.extract_strided_slice %5 {offsets = [16, 0], sizes = [16, 128], strides = [1, 1]} : vector<48x256xf32> to vector<16x128xf32>
    %8 = vector.extract_strided_slice %5 {offsets = [32, 0], sizes = [16, 128], strides = [1, 1]} : vector<48x256xf32> to vector<16x128xf32>
    %9 = vector.extract_strided_slice %5 {offsets = [0, 128], sizes = [16, 128], strides = [1, 1]} : vector<48x256xf32> to vector<16x128xf32>
    %10 = vector.extract_strided_slice %5 {offsets = [16, 128], sizes = [16, 128], strides = [1, 1]} : vector<48x256xf32> to vector<16x128xf32>
    %11 = vector.extract_strided_slice %5 {offsets = [32, 128], sizes = [16, 128], strides = [1, 1]} : vector<48x256xf32> to vector<16x128xf32>
    %12 = arith.mulf %6, %6 : vector<16x128xf32>
    %13 = arith.mulf %7, %7 : vector<16x128xf32>
    %14 = arith.addf %12, %13 : vector<16x128xf32>
    %15 = arith.mulf %8, %8 : vector<16x128xf32>
    %16 = arith.addf %14, %15 : vector<16x128xf32>
    %17 = math.sqrt %16 : vector<16x128xf32>
    %18 = arith.truncf %17 : vector<16x128xf32> to vector<16x128xbf16>
    %c0_6 = arith.constant 0 : index
    %c0_7 = arith.constant 0 : index
    %19 = vector.load %arg4[%c0_6, %c0_7] : memref<128x128xbf16, #tpu.memory_space<vmem>>, vector<128x128xbf16>
    %cst_8 = arith.constant dense<0.000000e+00> : vector<16x128xf32>
    %20 = tpu.matmul %18, %19, %cst_8 {dimension_numbers = #tpu.dot_dimension_numbers<[1], [0], [0], [1], [0, 0, 1, 1], [], []>} : vector<16x128xbf16>, vector<128x128xbf16>, vector<16x128xf32> -> vector<16x128xf32>
    %21 = arith.truncf %1 : vector<16x128xf32> to vector<16x128xbf16>
    %c0_9 = arith.constant 0 : index
    %c0_10 = arith.constant 0 : index
    %22 = vector.load %arg5[%c0_9, %c0_10] : memref<128x128xbf16, #tpu.memory_space<vmem>>, vector<128x128xbf16>
    %cst_11 = arith.constant dense<0.000000e+00> : vector<16x128xf32>
    %23 = tpu.matmul %21, %22, %cst_11 {dimension_numbers = #tpu.dot_dimension_numbers<[1], [0], [0], [1], [0, 0, 1, 1], [], []>} : vector<16x128xbf16>, vector<128x128xbf16>, vector<16x128xf32> -> vector<16x128xf32>
    %24 = arith.addf %20, %23 : vector<16x128xf32>
    %c0_12 = arith.constant 0 : index
    %c0_13 = arith.constant 0 : index
    %25 = vector.load %arg6[%c0_12, %c0_13] : memref<1x128xf32, #tpu.memory_space<vmem>>, vector<1x128xf32>
    %26 = vector.broadcast %25 : vector<1x128xf32> to vector<16x128xf32>
    %27 = arith.addf %24, %26 : vector<16x128xf32>
    %c0_14 = arith.constant 0 : index
    %c0_15 = arith.constant 0 : index
    %28 = vector.load %arg7[%c0_14, %c0_15] : memref<1x128xf32, #tpu.memory_space<vmem>>, vector<1x128xf32>
    %c0_16 = arith.constant 0 : index
    %c0_17 = arith.constant 0 : index
    %29 = vector.load %arg8[%c0_16, %c0_17] : memref<1x128xf32, #tpu.memory_space<vmem>>, vector<1x128xf32>
    %cst_18 = arith.constant dense<0.000000e+00> : vector<16xf32>
    %30 = vector.multi_reduction <add>, %27, %cst_18 [1] : vector<16x128xf32> to vector<16xf32>
    %31 = vector.shape_cast %30 : vector<16xf32> to vector<16x1xf32>
    %cst_19 = arith.constant 1.280000e+02 : f32
    %32 = vector.broadcast %cst_19 : f32 to vector<16x1xf32>
    %33 = arith.divf %31, %32 : vector<16x1xf32>
    %34 = vector.broadcast %33 : vector<16x1xf32> to vector<16x128xf32>
    %35 = arith.subf %27, %34 : vector<16x128xf32>
    %36 = arith.mulf %35, %35 : vector<16x128xf32>
    %cst_20 = arith.constant dense<0.000000e+00> : vector<16xf32>
    %37 = vector.multi_reduction <add>, %36, %cst_20 [1] : vector<16x128xf32> to vector<16xf32>
    %38 = vector.shape_cast %37 : vector<16xf32> to vector<16x1xf32>
    %cst_21 = arith.constant 1.280000e+02 : f32
    %39 = vector.broadcast %cst_21 : f32 to vector<16x1xf32>
    %40 = arith.divf %38, %39 : vector<16x1xf32>
    %cst_22 = arith.constant 9.99999974E-6 : f32
    %41 = vector.broadcast %cst_22 : f32 to vector<16x1xf32>
    %42 = arith.addf %40, %41 : vector<16x1xf32>
    %43 = math.rsqrt %42 : vector<16x1xf32>
    %44 = vector.broadcast %43 : vector<16x1xf32> to vector<16x128xf32>
    %45 = arith.mulf %35, %44 : vector<16x128xf32>
    %46 = vector.broadcast %28 : vector<1x128xf32> to vector<16x128xf32>
    %47 = arith.mulf %45, %46 : vector<16x128xf32>
    %48 = vector.broadcast %29 : vector<1x128xf32> to vector<16x128xf32>
    %49 = arith.addf %47, %48 : vector<16x128xf32>
    %50 = arith.negf %49 : vector<16x128xf32>
    %51 = math.exp %50 : vector<16x128xf32>
    %cst_23 = arith.constant 1.000000e+00 : f32
    %52 = vector.broadcast %cst_23 : f32 to vector<16x128xf32>
    %53 = arith.addf %52, %51 : vector<16x128xf32>
    %54 = arith.divf %52, %53 : vector<16x128xf32>
    %55 = arith.mulf %49, %54 : vector<16x128xf32>
    %56 = arith.truncf %55 : vector<16x128xf32> to vector<16x128xbf16>
    %c0_24 = arith.constant 0 : index
    %c0_25 = arith.constant 0 : index
    %57 = vector.load %arg9[%c0_24, %c0_25] : memref<128x128xbf16, #tpu.memory_space<vmem>>, vector<128x128xbf16>
    %cst_26 = arith.constant dense<0.000000e+00> : vector<16x128xf32>
    %58 = tpu.matmul %56, %57, %cst_26 {dimension_numbers = #tpu.dot_dimension_numbers<[1], [0], [0], [1], [0, 0, 1, 1], [], []>} : vector<16x128xbf16>, vector<128x128xbf16>, vector<16x128xf32> -> vector<16x128xf32>
    %c0_27 = arith.constant 0 : index
    %c0_28 = arith.constant 0 : index
    %59 = vector.load %arg10[%c0_27, %c0_28] : memref<1x128xf32, #tpu.memory_space<vmem>>, vector<1x128xf32>
    %60 = vector.broadcast %59 : vector<1x128xf32> to vector<16x128xf32>
    %61 = arith.addf %58, %60 : vector<16x128xf32>
    %c0_29 = arith.constant 0 : index
    %c0_30 = arith.constant 0 : index
    %62 = vector.load %arg11[%c0_29, %c0_30] : memref<1x128xf32, #tpu.memory_space<vmem>>, vector<1x128xf32>
    %c0_31 = arith.constant 0 : index
    %c0_32 = arith.constant 0 : index
    %63 = vector.load %arg12[%c0_31, %c0_32] : memref<1x128xf32, #tpu.memory_space<vmem>>, vector<1x128xf32>
    %cst_33 = arith.constant dense<0.000000e+00> : vector<16xf32>
    %64 = vector.multi_reduction <add>, %61, %cst_33 [1] : vector<16x128xf32> to vector<16xf32>
    %65 = vector.shape_cast %64 : vector<16xf32> to vector<16x1xf32>
    %cst_34 = arith.constant 1.280000e+02 : f32
    %66 = vector.broadcast %cst_34 : f32 to vector<16x1xf32>
    %67 = arith.divf %65, %66 : vector<16x1xf32>
    %68 = vector.broadcast %67 : vector<16x1xf32> to vector<16x128xf32>
    %69 = arith.subf %61, %68 : vector<16x128xf32>
    %70 = arith.mulf %69, %69 : vector<16x128xf32>
    %cst_35 = arith.constant dense<0.000000e+00> : vector<16xf32>
    %71 = vector.multi_reduction <add>, %70, %cst_35 [1] : vector<16x128xf32> to vector<16xf32>
    %72 = vector.shape_cast %71 : vector<16xf32> to vector<16x1xf32>
    %cst_36 = arith.constant 1.280000e+02 : f32
    %73 = vector.broadcast %cst_36 : f32 to vector<16x1xf32>
    %74 = arith.divf %72, %73 : vector<16x1xf32>
    %cst_37 = arith.constant 9.99999974E-6 : f32
    %75 = vector.broadcast %cst_37 : f32 to vector<16x1xf32>
    %76 = arith.addf %74, %75 : vector<16x1xf32>
    %77 = math.rsqrt %76 : vector<16x1xf32>
    %78 = vector.broadcast %77 : vector<16x1xf32> to vector<16x128xf32>
    %79 = arith.mulf %69, %78 : vector<16x128xf32>
    %80 = vector.broadcast %62 : vector<1x128xf32> to vector<16x128xf32>
    %81 = arith.mulf %79, %80 : vector<16x128xf32>
    %82 = vector.broadcast %63 : vector<1x128xf32> to vector<16x128xf32>
    %83 = arith.addf %81, %82 : vector<16x128xf32>
    %84 = arith.negf %83 : vector<16x128xf32>
    %85 = math.exp %84 : vector<16x128xf32>
    %cst_38 = arith.constant 1.000000e+00 : f32
    %86 = vector.broadcast %cst_38 : f32 to vector<16x128xf32>
    %87 = arith.addf %86, %85 : vector<16x128xf32>
    %88 = arith.divf %86, %87 : vector<16x128xf32>
    %89 = arith.mulf %83, %88 : vector<16x128xf32>
    %90 = arith.truncf %89 : vector<16x128xf32> to vector<16x128xbf16>
    %c0_39 = arith.constant 0 : index
    %c0_40 = arith.constant 0 : index
    %91 = vector.load %arg13[%c0_39, %c0_40] : memref<128x128xbf16, #tpu.memory_space<vmem>>, vector<128x128xbf16>
    %cst_41 = arith.constant dense<0.000000e+00> : vector<16x128xf32>
    %92 = tpu.matmul %90, %91, %cst_41 {dimension_numbers = #tpu.dot_dimension_numbers<[1], [0], [0], [1], [0, 0, 1, 1], [], []>} : vector<16x128xbf16>, vector<128x128xbf16>, vector<16x128xf32> -> vector<16x128xf32>
    %c0_42 = arith.constant 0 : index
    %c0_43 = arith.constant 0 : index
    %93 = vector.load %arg16[%c0_42, %c0_43] : memref<1x128xf32, #tpu.memory_space<vmem>>, vector<1x128xf32>
    %94 = vector.broadcast %93 : vector<1x128xf32> to vector<16x128xf32>
    %95 = arith.addf %92, %94 : vector<16x128xf32>
    %c0_44 = arith.constant 0 : index
    %c0_45 = arith.constant 0 : index
    %96 = vector.load %arg14[%c0_44, %c0_45] : memref<128x128xbf16, #tpu.memory_space<vmem>>, vector<128x128xbf16>
    %cst_46 = arith.constant dense<0.000000e+00> : vector<16x128xf32>
    %97 = tpu.matmul %90, %96, %cst_46 {dimension_numbers = #tpu.dot_dimension_numbers<[1], [0], [0], [1], [0, 0, 1, 1], [], []>} : vector<16x128xbf16>, vector<128x128xbf16>, vector<16x128xf32> -> vector<16x128xf32>
    %c0_47 = arith.constant 0 : index
    %c0_48 = arith.constant 0 : index
    %98 = vector.load %arg17[%c0_47, %c0_48] : memref<1x128xf32, #tpu.memory_space<vmem>>, vector<1x128xf32>
    %99 = vector.broadcast %98 : vector<1x128xf32> to vector<16x128xf32>
    %100 = arith.addf %97, %99 : vector<16x128xf32>
    %c0_49 = arith.constant 0 : index
    %c0_50 = arith.constant 0 : index
    %101 = vector.load %arg15[%c0_49, %c0_50] : memref<128x128xbf16, #tpu.memory_space<vmem>>, vector<128x128xbf16>
    %cst_51 = arith.constant dense<0.000000e+00> : vector<16x128xf32>
    %102 = tpu.matmul %90, %101, %cst_51 {dimension_numbers = #tpu.dot_dimension_numbers<[1], [0], [0], [1], [0, 0, 1, 1], [], []>} : vector<16x128xbf16>, vector<128x128xbf16>, vector<16x128xf32> -> vector<16x128xf32>
    %c0_52 = arith.constant 0 : index
    %c0_53 = arith.constant 0 : index
    %103 = vector.load %arg18[%c0_52, %c0_53] : memref<1x128xf32, #tpu.memory_space<vmem>>, vector<1x128xf32>
    %104 = vector.broadcast %103 : vector<1x128xf32> to vector<16x128xf32>
    %105 = arith.addf %102, %104 : vector<16x128xf32>
    %106 = arith.mulf %16, %100 : vector<16x128xf32>
    %107 = arith.addf %1, %106 : vector<16x128xf32>
    %108 = arith.addf %107, %105 : vector<16x128xf32>
    %c0_54 = arith.constant 0 : index
    %c0_55 = arith.constant 0 : index
    %109 = vector.load %arg20[%c0_54, %c0_55] : memref<16x128xf32, #tpu.memory_space<vmem>>, vector<16x128xf32>
    tpu.vector_store %arg20[%c0_54, %c0_55], %108 {strides = array<i32>} : memref<16x128xf32, #tpu.memory_space<vmem>>, vector<16x128xf32>,
    %110 = vector.extract_strided_slice %0 {offsets = [0, 0, 0], sizes = [1, 16, 128], strides = [1, 1, 1]} : vector<3x16x128xf32> to vector<1x16x128xf32>
    %111 = vector.shape_cast %110 : vector<1x16x128xf32> to vector<16x128xf32>
    %112 = arith.mulf %9, %95 : vector<16x128xf32>
    %113 = arith.addf %111, %112 : vector<16x128xf32>
    %c0_56 = arith.constant 0 : index
    %c0_57 = arith.constant 0 : index
    %c0_58 = arith.constant 0 : index
    %114 = vector.load %arg19[%c0_56, %c0_57, %c0_58] : memref<3x16x128xf32, #tpu.memory_space<vmem>>, vector<1x16x128xf32>
    %115 = vector.shape_cast %114 : vector<1x16x128xf32> to vector<16x128xf32>
    %116 = vector.shape_cast %113 : vector<16x128xf32> to vector<1x16x128xf32>
    tpu.vector_store %arg19[%c0_56, %c0_57, %c0_58], %116 {strides = array<i32>} : memref<3x16x128xf32, #tpu.memory_space<vmem>>, vector<1x16x128xf32>,
    %117 = vector.extract_strided_slice %0 {offsets = [1, 0, 0], sizes = [1, 16, 128], strides = [1, 1, 1]} : vector<3x16x128xf32> to vector<1x16x128xf32>
    %118 = vector.shape_cast %117 : vector<1x16x128xf32> to vector<16x128xf32>
    %119 = arith.mulf %10, %95 : vector<16x128xf32>
    %120 = arith.addf %118, %119 : vector<16x128xf32>
    %c1 = arith.constant 1 : index
    %c0_59 = arith.constant 0 : index
    %c0_60 = arith.constant 0 : index
    %121 = vector.load %arg19[%c1, %c0_59, %c0_60] : memref<3x16x128xf32, #tpu.memory_space<vmem>>, vector<1x16x128xf32>
    %122 = vector.shape_cast %121 : vector<1x16x128xf32> to vector<16x128xf32>
    %123 = vector.shape_cast %120 : vector<16x128xf32> to vector<1x16x128xf32>
    tpu.vector_store %arg19[%c1, %c0_59, %c0_60], %123 {strides = array<i32>} : memref<3x16x128xf32, #tpu.memory_space<vmem>>, vector<1x16x128xf32>,
    %124 = vector.extract_strided_slice %0 {offsets = [2, 0, 0], sizes = [1, 16, 128], strides = [1, 1, 1]} : vector<3x16x128xf32> to vector<1x16x128xf32>
    %125 = vector.shape_cast %124 : vector<1x16x128xf32> to vector<16x128xf32>
    %126 = arith.mulf %11, %95 : vector<16x128xf32>
    %127 = arith.addf %125, %126 : vector<16x128xf32>
    %c2 = arith.constant 2 : index
    %c0_61 = arith.constant 0 : index
    %c0_62 = arith.constant 0 : index
    %128 = vector.load %arg19[%c2, %c0_61, %c0_62] : memref<3x16x128xf32, #tpu.memory_space<vmem>>, vector<1x16x128xf32>
    %129 = vector.shape_cast %128 : vector<1x16x128xf32> to vector<16x128xf32>
    %130 = vector.shape_cast %127 : vector<16x128xf32> to vector<1x16x128xf32>
    tpu.vector_store %arg19[%c2, %c0_61, %c0_62], %130 {strides = array<i32>} : memref<3x16x128xf32, #tpu.memory_space<vmem>>, vector<1x16x128xf32>,
    return
  }
  func.func @transform_0(%arg0: i32) -> (i32, i32, i32) {
    %c0_i32 = arith.constant 0 : i32
    %c0_i32_0 = arith.constant 0 : i32
    %c0_i32_1 = arith.constant 0 : i32
    return %c0_i32, %arg0, %c0_i32_0 : i32, i32, i32
  }
  func.func @transform_1(%arg0: i32) -> (i32, i32) {
    %c0_i32 = arith.constant 0 : i32
    %c0_i32_0 = arith.constant 0 : i32
    return %arg0, %c0_i32 : i32, i32
  }
  func.func @transform_2(%arg0: i32) -> (i32, i32) {
    %c0_i32 = arith.constant 0 : i32
    %c0_i32_0 = arith.constant 0 : i32
    %c0_i32_1 = arith.constant 0 : i32
    return %c0_i32, %c0_i32_0 : i32, i32
  }
  func.func @transform_3(%arg0: i32) -> (i32, i32) {
    %c0_i32 = arith.constant 0 : i32
    %c0_i32_0 = arith.constant 0 : i32
    %c0_i32_1 = arith.constant 0 : i32
    return %c0_i32, %c0_i32_0 : i32, i32
  }
  func.func @transform_4(%arg0: i32) -> (i32, i32) {
    %c0_i32 = arith.constant 0 : i32
    %c0_i32_0 = arith.constant 0 : i32
    %c0_i32_1 = arith.constant 0 : i32
    return %c0_i32, %c0_i32_0 : i32, i32
  }
  func.func @transform_5(%arg0: i32) -> (i32, i32) {
    %c0_i32 = arith.constant 0 : i32
    %c0_i32_0 = arith.constant 0 : i32
    %c0_i32_1 = arith.constant 0 : i32
    return %c0_i32, %c0_i32_0 : i32, i32
  }
  func.func @transform_6(%arg0: i32) -> (i32, i32) {
    %c0_i32 = arith.constant 0 : i32
    %c0_i32_0 = arith.constant 0 : i32
    %c0_i32_1 = arith.constant 0 : i32
    return %c0_i32, %c0_i32_0 : i32, i32
  }
  func.func @transform_7(%arg0: i32) -> (i32, i32) {
    %c0_i32 = arith.constant 0 : i32
    %c0_i32_0 = arith.constant 0 : i32
    %c0_i32_1 = arith.constant 0 : i32
    return %c0_i32, %c0_i32_0 : i32, i32
  }
  func.func @transform_8(%arg0: i32) -> (i32, i32) {
    %c0_i32 = arith.constant 0 : i32
    %c0_i32_0 = arith.constant 0 : i32
    %c0_i32_1 = arith.constant 0 : i32
    return %c0_i32, %c0_i32_0 : i32, i32
  }
  func.func @transform_9(%arg0: i32) -> (i32, i32) {
    %c0_i32 = arith.constant 0 : i32
    %c0_i32_0 = arith.constant 0 : i32
    %c0_i32_1 = arith.constant 0 : i32
    return %c0_i32, %c0_i32_0 : i32, i32
  }
  func.func @transform_10(%arg0: i32) -> (i32, i32) {
    %c0_i32 = arith.constant 0 : i32
    %c0_i32_0 = arith.constant 0 : i32
    %c0_i32_1 = arith.constant 0 : i32
    return %c0_i32, %c0_i32_0 : i32, i32
  }
  func.func @transform_11(%arg0: i32) -> (i32, i32) {
    %c0_i32 = arith.constant 0 : i32
    %c0_i32_0 = arith.constant 0 : i32
    %c0_i32_1 = arith.constant 0 : i32
    return %c0_i32, %c0_i32_0 : i32, i32
  }
  func.func @transform_12(%arg0: i32) -> (i32, i32) {
    %c0_i32 = arith.constant 0 : i32
    %c0_i32_0 = arith.constant 0 : i32
    %c0_i32_1 = arith.constant 0 : i32
    return %c0_i32, %c0_i32_0 : i32, i32
  }
  func.func @transform_13(%arg0: i32) -> (i32, i32) {
    %c0_i32 = arith.constant 0 : i32
    %c0_i32_0 = arith.constant 0 : i32
    %c0_i32_1 = arith.constant 0 : i32
    return %c0_i32, %c0_i32_0 : i32, i32
  }
  func.func @transform_14(%arg0: i32) -> (i32, i32) {
    %c0_i32 = arith.constant 0 : i32
    %c0_i32_0 = arith.constant 0 : i32
    %c0_i32_1 = arith.constant 0 : i32
    return %c0_i32, %c0_i32_0 : i32, i32
  }
  func.func @transform_15(%arg0: i32) -> (i32, i32) {
    %c0_i32 = arith.constant 0 : i32
    %c0_i32_0 = arith.constant 0 : i32
    %c0_i32_1 = arith.constant 0 : i32
    return %c0_i32, %c0_i32_0 : i32, i32
  }
  func.func @transform_16(%arg0: i32) -> (i32, i32) {
    %c0_i32 = arith.constant 0 : i32
    %c0_i32_0 = arith.constant 0 : i32
    %c0_i32_1 = arith.constant 0 : i32
    return %c0_i32, %c0_i32_0 : i32, i32
  }
  func.func @transform_17(%arg0: i32) -> (i32, i32) {
    %c0_i32 = arith.constant 0 : i32
    %c0_i32_0 = arith.constant 0 : i32
    %c0_i32_1 = arith.constant 0 : i32
    return %c0_i32, %c0_i32_0 : i32, i32
  }
  func.func @transform_18(%arg0: i32) -> (i32, i32, i32) {
    %c0_i32 = arith.constant 0 : i32
    %c0_i32_0 = arith.constant 0 : i32
    %c0_i32_1 = arith.constant 0 : i32
    return %c0_i32, %arg0, %c0_i32_0 : i32, i32, i32
  }
  func.func @transform_19(%arg0: i32) -> (i32, i32) {
    %c0_i32 = arith.constant 0 : i32
    %c0_i32_0 = arith.constant 0 : i32
    return %arg0, %c0_i32 : i32, i32
  }
}

</mosaic_0001>

<llo_original>
// kernel: tpu_custom_call.1
$region0: #{tpu_custom_call.1}
  #allocation0 [shape = 'u32[]', space=smem, size = 0x4, offset = 0x4, fixed_abs, tag = 'smem constant byte address 0x4 - core index']
  #allocation1 [shape = 'u32[72,128]{1,0:T(1,128)}', space=vmem, size = 0x9000, scoped, tag = 'internal scratch']
  %s0 = inlined_call_operand.hbm [shape: f32[3,16,128], index: 0, kind: input, shape index: {}]
  %s1 = inlined_call_operand.hbm [shape: f32[16,128], index: 1, kind: input, shape index: {}]
  %s2 = inlined_call_operand.hbm [shape: bf16[128,256], index: 2, kind: input, shape index: {}]
  %s3 = inlined_call_operand.hbm [shape: bf16[128,128], index: 3, kind: input, shape index: {}]
  %s4 = inlined_call_operand.hbm [shape: bf16[128,128], index: 4, kind: input, shape index: {}]
  %s5 = inlined_call_operand.vmem [shape: f32[1,128], index: 5, kind: input, shape index: {}]
  %s6 = inlined_call_operand.vmem [shape: f32[1,128], index: 6, kind: input, shape index: {}]
  %s7 = inlined_call_operand.vmem [shape: f32[1,128], index: 7, kind: input, shape index: {}]
  %s8 = inlined_call_operand.hbm [shape: bf16[128,128], index: 8, kind: input, shape index: {}]
  %s9 = inlined_call_operand.vmem [shape: f32[1,128], index: 9, kind: input, shape index: {}]
  %s10 = inlined_call_operand.vmem [shape: f32[1,128], index: 10, kind: input, shape index: {}]
  %s11 = inlined_call_operand.vmem [shape: f32[1,128], index: 11, kind: input, shape index: {}]
  %s12 = inlined_call_operand.hbm [shape: bf16[128,128], index: 12, kind: input, shape index: {}]
  %s13 = inlined_call_operand.hbm [shape: bf16[128,128], index: 13, kind: input, shape index: {}]
  %s14 = inlined_call_operand.hbm [shape: bf16[128,128], index: 14, kind: input, shape index: {}]
  %s15 = inlined_call_operand.vmem [shape: f32[1,128], index: 15, kind: input, shape index: {}]
  %s16 = inlined_call_operand.vmem [shape: f32[1,128], index: 16, kind: input, shape index: {}]
  %s17 = inlined_call_operand.vmem [shape: f32[1,128], index: 17, kind: input, shape index: {}]
  %s18 = inlined_call_operand.hbm [shape: f32[3,16,128], index: 18, kind: output, shape index: {0}]
  %s19 = inlined_call_operand.hbm [shape: f32[16,128], index: 19, kind: output, shape index: {1}]
  %20 = xla_tuple %s18, %s19
  %s21 = sld [smem:[#allocation0]]
  $region126: #{tpu_custom_call.1} parent=0
    _
  %s23 = ssub.s32 1, %s21
  %s24 = scalar_select 0, %s23, %s21
  $region1: #{tpu_custom_call.1} parent=0
    #allocation2 [shape = 'u8[24576]{0}', space=vmem, size = 0x6000, scoped, tag = 'input window, operand 0, single buffered']
    #allocation3 [shape = 's32[1]{0}', space=sflag, size = 0x4, scoped, tag = 'scoped memory for tpu_custom_call.1']
    #allocation4 [shape = 's32[1]{0}', space=sflag, size = 0x4, scoped, tag = 'scoped memory for tpu_custom_call.1']
    #allocation5 [shape = 'u8[8192]{0}', space=vmem, size = 0x2000, scoped, tag = 'input window, operand 1, single buffered']
    #allocation6 [shape = 's32[1]{0}', space=sflag, size = 0x4, scoped, tag = 'scoped memory for tpu_custom_call.1']
    #allocation7 [shape = 'u8[65536]{0}', space=vmem, size = 0x10000, scoped, tag = 'input window, operand 2, single buffered']
    #allocation8 [shape = 'u8[32768]{0}', space=vmem, size = 0x8000, scoped, tag = 'input window, operand 3, single buffered']
    #allocation9 [shape = 's32[1]{0}', space=sflag, size = 0x4, scoped, tag = 'scoped memory for tpu_custom_call.1']
    #allocation10 [shape = 'u8[32768]{0}', space=vmem, size = 0x8000, scoped, tag = 'input window, operand 4, single buffered']
    #allocation11 [shape = 'u8[32768]{0}', space=vmem, size = 0x8000, scoped, tag = 'input window, operand 8, single buffered']
    #allocation12 [shape = 's32[1]{0}', space=sflag, size = 0x4, scoped, tag = 'scoped memory for tpu_custom_call.1']
    #allocation13 [shape = 'u8[32768]{0}', space=vmem, size = 0x8000, scoped, tag = 'input window, operand 12, single buffered']
    #allocation14 [shape = 'u8[32768]{0}', space=vmem, size = 0x8000, scoped, tag = 'input window, operand 13, single buffered']
    #allocation15 [shape = 's32[1]{0}', space=sflag, size = 0x4, scoped, tag = 'scoped memory for tpu_custom_call.1']
    #allocation16 [shape = 'u8[32768]{0}', space=vmem, size = 0x8000, scoped, tag = 'input window, operand 14, single buffered']
    #allocation17 [shape = 'u8[24576]{0}', space=vmem, size = 0x6000, scoped, tag = 'output window, operand 0, single buffered']
    #allocation18 [shape = 'u8[8192]{0}', space=vmem, size = 0x2000, scoped, tag = 'output window, operand 1, single buffered']
    #allocation19 [shape = 's32[1]{0}', space=sflag, size = 0x4, scoped, tag = 'scoped memory for tpu_custom_call.1']
    %25 = vsyncpa [#allocation3], 0
    %26 = vsyncpa [#allocation6], 0
    %27 = vsyncpa [#allocation9], 0
    %28 = vsyncpa [#allocation12], 0
    %29 = vsyncpa [#allocation15], 0
    %30 = vsyncpa [#allocation4], 0
    %31 = vsyncpa [#allocation19], 0
    // Predicated region
    $region2: #{tpu_custom_call.1} parent=1 // pred_check
      _
    $region3: #{tpu_custom_call.1} parent=1 // pred_check_branch
      %33 = sbr.rel (0) target = $region5
    $region4: #{tpu_custom_call.1} parent=1 // pred_region
      %35 = vsyncadd [#allocation3], 0
      %s36 = sshll.u32 %s0, 4
      %s37 = int_to_ptr.hbm [resolvable:$true] %s36
      %s38 = sshll.u32 [#allocation2], 4
      %s39 = int_to_ptr.vmem [resolvable:$true] %s38
      %44 = dma.hbm_to_vmem [thread:$0]  %s37, 768, %s39, [#allocation3], 128, 128, 8
    $region5: #{tpu_custom_call.1} parent=1 // pred_fallthru
      _
    // Predicated region
    $region6: #{tpu_custom_call.1} parent=1 // pred_check
      _
    $region7: #{tpu_custom_call.1} parent=1 // pred_check_branch
      %46 = sbr.rel (0) target = $region9
    $region8: #{tpu_custom_call.1} parent=1 // pred_region
      %48 = vsyncadd [#allocation6], 0
      %s49 = sshll.u32 %s1, 4
      %s50 = int_to_ptr.hbm [resolvable:$true] %s49
      %s51 = sshll.u32 [#allocation5], 4
      %s52 = int_to_ptr.vmem [resolvable:$true] %s51
      %57 = dma.hbm_to_vmem [thread:$0]  %s50, 256, %s52, [#allocation6], 128, 128, 8
    $region9: #{tpu_custom_call.1} parent=1 // pred_fallthru
      _
    // Predicated region
    $region10: #{tpu_custom_call.1} parent=1 // pred_check
      _
    $region11: #{tpu_custom_call.1} parent=1 // pred_check_branch
      %59 = sbr.rel (0) target = $region13
    $region12: #{tpu_custom_call.1} parent=1 // pred_region
      %61 = vsyncadd [#allocation6], 0
      %s62 = sshll.u32 %s2, 4
      %s63 = int_to_ptr.hbm [resolvable:$true] %s62
      %s64 = sshll.u32 [#allocation7], 4
      %s65 = int_to_ptr.vmem [resolvable:$true] %s64
      %70 = dma.hbm_to_vmem [thread:$0]  %s63, 2048, %s65, [#allocation6], 128, 128, 8
    $region13: #{tpu_custom_call.1} parent=1 // pred_fallthru
      _
    // Predicated region
    $region14: #{tpu_custom_call.1} parent=1 // pred_check
      _
    $region15: #{tpu_custom_call.1} parent=1 // pred_check_branch
      %72 = sbr.rel (0) target = $region17
    $region16: #{tpu_custom_call.1} parent=1 // pred_region
      %74 = vsyncadd [#allocation9], 0
      %s75 = sshll.u32 %s3, 4
      %s76 = int_to_ptr.hbm [resolvable:$true] %s75
      %s77 = sshll.u32 [#allocation8], 4
      %s78 = int_to_ptr.vmem [resolvable:$true] %s77
      %83 = dma.hbm_to_vmem [thread:$0]  %s76, 1024, %s78, [#allocation9], 64, 64, 4
    $region17: #{tpu_custom_call.1} parent=1 // pred_fallthru
      _
    // Predicated region
    $region18: #{tpu_custom_call.1} parent=1 // pred_check
      _
    $region19: #{tpu_custom_call.1} parent=1 // pred_check_branch
      %85 = sbr.rel (0) target = $region21
    $region20: #{tpu_custom_call.1} parent=1 // pred_region
      %87 = vsyncadd [#allocation9], 0
      %s88 = sshll.u32 %s4, 4
      %s89 = int_to_ptr.hbm [resolvable:$true] %s88
      %s90 = sshll.u32 [#allocation10], 4
      %s91 = int_to_ptr.vmem [resolvable:$true] %s90
      %96 = dma.hbm_to_vmem [thread:$0]  %s89, 1024, %s91, [#allocation9], 64, 64, 4
    $region21: #{tpu_custom_call.1} parent=1 // pred_fallthru
      _
    // Predicated region
    $region22: #{tpu_custom_call.1} parent=1 // pred_check
      _
    $region23: #{tpu_custom_call.1} parent=1 // pred_check_branch
      %98 = sbr.rel (0) target = $region25
    $region24: #{tpu_custom_call.1} parent=1 // pred_region
      _
    $region25: #{tpu_custom_call.1} parent=1 // pred_fallthru
      _
    // Predicated region
    $region26: #{tpu_custom_call.1} parent=1 // pred_check
      _
    $region27: #{tpu_custom_call.1} parent=1 // pred_check_branch
      %100 = sbr.rel (0) target = $region29
    $region28: #{tpu_custom_call.1} parent=1 // pred_region
      _
    $region29: #{tpu_custom_call.1} parent=1 // pred_fallthru
      _
    // Predicated region
    $region30: #{tpu_custom_call.1} parent=1 // pred_check
      _
    $region31: #{tpu_custom_call.1} parent=1 // pred_check_branch
      %102 = sbr.rel (0) target = $region33
    $region32: #{tpu_custom_call.1} parent=1 // pred_region
      _
    $region33: #{tpu_custom_call.1} parent=1 // pred_fallthru
      _
    // Predicated region
    $region34: #{tpu_custom_call.1} parent=1 // pred_check
      _
    $region35: #{tpu_custom_call.1} parent=1 // pred_check_branch
      %104 = sbr.rel (0) target = $region37
    $region36: #{tpu_custom_call.1} parent=1 // pred_region
      %106 = vsyncadd [#allocation12], 0
      %s107 = sshll.u32 %s8, 4
      %s108 = int_to_ptr.hbm [resolvable:$true] %s107
      %s109 = sshll.u32 [#allocation11], 4
      %s110 = int_to_ptr.vmem [resolvable:$true] %s109
      %115 = dma.hbm_to_vmem [thread:$0]  %s108, 1024, %s110, [#allocation12], 64, 64, 4
    $region37: #{tpu_custom_call.1} parent=1 // pred_fallthru
      _
    // Predicated region
    $region38: #{tpu_custom_call.1} parent=1 // pred_check
      _
    $region39: #{tpu_custom_call.1} parent=1 // pred_check_branch
      %117 = sbr.rel (0) target = $region41
    $region40: #{tpu_custom_call.1} parent=1 // pred_region
      _
    $region41: #{tpu_custom_call.1} parent=1 // pred_fallthru
      _
    // Predicated region
    $region42: #{tpu_custom_call.1} parent=1 // pred_check
      _
    $region43: #{tpu_custom_call.1} parent=1 // pred_check_branch
      %119 = sbr.rel (0) target = $region45
    $region44: #{tpu_custom_call.1} parent=1 // pred_region
      _
    $region45: #{tpu_custom_call.1} parent=1 // pred_fallthru
      _
    // Predicated region
    $region46: #{tpu_custom_call.1} parent=1 // pred_check
      _
    $region47: #{tpu_custom_call.1} parent=1 // pred_check_branch
      %121 = sbr.rel (0) target = $region49
    $region48: #{tpu_custom_call.1} parent=1 // pred_region
      _
    $region49: #{tpu_custom_call.1} parent=1 // pred_fallthru
      _
    // Predicated region
    $region50: #{tpu_custom_call.1} parent=1 // pred_check
      _
    $region51: #{tpu_custom_call.1} parent=1 // pred_check_branch
      %123 = sbr.rel (0) target = $region53
    $region52: #{tpu_custom_call.1} parent=1 // pred_region
      %125 = vsyncadd [#allocation12], 0
      %s126 = sshll.u32 %s12, 4
      %s127 = int_to_ptr.hbm [resolvable:$true] %s126
      %s128 = sshll.u32 [#allocation13], 4
      %s129 = int_to_ptr.vmem [resolvable:$true] %s128
      %134 = dma.hbm_to_vmem [thread:$0]  %s127, 1024, %s129, [#allocation12], 64, 64, 4
    $region53: #{tpu_custom_call.1} parent=1 // pred_fallthru
      _
    // Predicated region
    $region54: #{tpu_custom_call.1} parent=1 // pred_check
      _
    $region55: #{tpu_custom_call.1} parent=1 // pred_check_branch
      %136 = sbr.rel (0) target = $region57
    $region56: #{tpu_custom_call.1} parent=1 // pred_region
      %138 = vsyncadd [#allocation15], 0
      %s139 = sshll.u32 %s13, 4
      %s140 = int_to_ptr.hbm [resolvable:$true] %s139
      %s141 = sshll.u32 [#allocation14], 4
      %s142 = int_to_ptr.vmem [resolvable:$true] %s141
      %147 = dma.hbm_to_vmem [thread:$0]  %s140, 1024, %s142, [#allocation15], 64, 64, 4
    $region57: #{tpu_custom_call.1} parent=1 // pred_fallthru
      _
    // Predicated region
    $region58: #{tpu_custom_call.1} parent=1 // pred_check
      _
    $region59: #{tpu_custom_call.1} parent=1 // pred_check_branch
      %149 = sbr.rel (0) target = $region61
    $region60: #{tpu_custom_call.1} parent=1 // pred_region
      %151 = vsyncadd [#allocation15], 0
      %s152 = sshll.u32 %s14, 4
      %s153 = int_to_ptr.hbm [resolvable:$true] %s152
      %s154 = sshll.u32 [#allocation16], 4
      %s155 = int_to_ptr.vmem [resolvable:$true] %s154
      %160 = dma.hbm_to_vmem [thread:$0]  %s153, 1024, %s155, [#allocation15], 64, 64, 4
    $region61: #{tpu_custom_call.1} parent=1 // pred_fallthru
      _
    // Predicated region
    $region62: #{tpu_custom_call.1} parent=1 // pred_check
      _
    $region63: #{tpu_custom_call.1} parent=1 // pred_check_branch
      %162 = sbr.rel (0) target = $region65
    $region64: #{tpu_custom_call.1} parent=1 // pred_region
      _
    $region65: #{tpu_custom_call.1} parent=1 // pred_fallthru
      _
    // Predicated region
    $region66: #{tpu_custom_call.1} parent=1 // pred_check
      _
    $region67: #{tpu_custom_call.1} parent=1 // pred_check_branch
      %164 = sbr.rel (0) target = $region69
    $region68: #{tpu_custom_call.1} parent=1 // pred_region
      _
    $region69: #{tpu_custom_call.1} parent=1 // pred_fallthru
      _
    // Predicated region
    $region70: #{tpu_custom_call.1} parent=1 // pred_check
      _
    $region71: #{tpu_custom_call.1} parent=1 // pred_check_branch
      %166 = sbr.rel (0) target = $region73
    $region72: #{tpu_custom_call.1} parent=1 // pred_region
      _
    $region73: #{tpu_custom_call.1} parent=1 // pred_fallthru
      _
    // Predicated region
    $region74: #{tpu_custom_call.1} parent=1 // pred_check
      _
    $region75: #{tpu_custom_call.1} parent=1 // pred_check_branch
      %168 = sbr.rel (0) target = $region77
    $region76: #{tpu_custom_call.1} parent=1 // pred_region
      %170 = dma.done [#allocation3], 768
    $region77: #{tpu_custom_call.1} parent=1 // pred_fallthru
      _
    // Predicated region
    $region78: #{tpu_custom_call.1} parent=1 // pred_check
      _
    $region79: #{tpu_custom_call.1} parent=1 // pred_check_branch
      %172 = sbr.rel (0) target = $region81
    $region80: #{tpu_custom_call.1} parent=1 // pred_region
      %174 = dma.done [#allocation6], 256
    $region81: #{tpu_custom_call.1} parent=1 // pred_fallthru
      _
    // Predicated region
    $region82: #{tpu_custom_call.1} parent=1 // pred_check
      _
    $region83: #{tpu_custom_call.1} parent=1 // pred_check_branch
      %176 = sbr.rel (0) target = $region85
    $region84: #{tpu_custom_call.1} parent=1 // pred_region
      %178 = dma.done [#allocation6], 2048
    $region85: #{tpu_custom_call.1} parent=1 // pred_fallthru
      _
    // Predicated region
    $region86: #{tpu_custom_call.1} parent=1 // pred_check
      _
    $region87: #{tpu_custom_call.1} parent=1 // pred_check_branch
      %180 = sbr.rel (0) target = $region89
    $region88: #{tpu_custom_call.1} parent=1 // pred_region
      %182 = dma.done [#allocation9], 1024
    $region89: #{tpu_custom_call.1} parent=1 // pred_fallthru
      _
    // Predicated region
    $region90: #{tpu_custom_call.1} parent=1 // pred_check
      _
    $region91: #{tpu_custom_call.1} parent=1 // pred_check_branch
      %184 = sbr.rel (0) target = $region93
    $region92: #{tpu_custom_call.1} parent=1 // pred_region
      %186 = dma.done [#allocation9], 1024
    $region93: #{tpu_custom_call.1} parent=1 // pred_fallthru
      _
    // Predicated region
    $region94: #{tpu_custom_call.1} parent=1 // pred_check
      _
    $region95: #{tpu_custom_call.1} parent=1 // pred_check_branch
      %188 = sbr.rel (0) target = $region97
    $region96: #{tpu_custom_call.1} parent=1 // pred_region
      %190 = dma.done [#allocation12], 1024
    $region97: #{tpu_custom_call.1} parent=1 // pred_fallthru
      _
    // Predicated region
    $region98: #{tpu_custom_call.1} parent=1 // pred_check
      _
    $region99: #{tpu_custom_call.1} parent=1 // pred_check_branch
      %192 = sbr.rel (0) target = $region101
    $region100: #{tpu_custom_call.1} parent=1 // pred_region
      %194 = dma.done [#allocation12], 1024
    $region101: #{tpu_custom_call.1} parent=1 // pred_fallthru
      _
    // Predicated region
    $region102: #{tpu_custom_call.1} parent=1 // pred_check
      _
    $region103: #{tpu_custom_call.1} parent=1 // pred_check_branch
      %196 = sbr.rel (0) target = $region105
    $region104: #{tpu_custom_call.1} parent=1 // pred_region
      %198 = dma.done [#allocation15], 1024
    $region105: #{tpu_custom_call.1} parent=1 // pred_fallthru
      _
    // Predicated region
    $region106: #{tpu_custom_call.1} parent=1 // pred_check
      _
    $region107: #{tpu_custom_call.1} parent=1 // pred_check_branch
      %200 = sbr.rel (0) target = $region109
    $region108: #{tpu_custom_call.1} parent=1 // pred_region
      %202 = dma.done [#allocation15], 1024
    $region109: #{tpu_custom_call.1} parent=1 // pred_fallthru
      _
    %v203 = vld [vmem:[#allocation2] sm:$0xff]
    %v204 = vld [vmem:[#allocation2 + $0x8] sm:$0xff]
    %v205 = vld [vmem:[#allocation2 + $0x10] sm:$0xff]
    %v206 = vld [vmem:[#allocation2 + $0x18] sm:$0xff]
    %v207 = vld [vmem:[#allocation2 + $0x20] sm:$0xff]
    %v208 = vld [vmem:[#allocation2 + $0x28] sm:$0xff]
    %v209 = vld [vmem:[#allocation5] sm:$0xff]
    %v210 = vld [vmem:[#allocation5 + $0x8] sm:$0xff]
    %v211 = vpack.c.bf16 %v204, %v203
    %v212 = vpack.c.bf16 %v206, %v205
    %v213 = vpack.c.bf16 %v208, %v207
    %v214 = vld [vmem:[#allocation7] sm:$0xff]
    %v215 = vld [vmem:[#allocation7 + $0x8] sm:$0xff]
    %v216 = vld [vmem:[#allocation7 + $0x10] sm:$0xff]
    %v217 = vld [vmem:[#allocation7 + $0x18] sm:$0xff]
    %v218 = vld [vmem:[#allocation7 + $0x20] sm:$0xff]
    %v219 = vld [vmem:[#allocation7 + $0x28] sm:$0xff]
    %v220 = vld [vmem:[#allocation7 + $0x30] sm:$0xff]
    %v221 = vld [vmem:[#allocation7 + $0x38] sm:$0xff]
    %v222 = vld [vmem:[#allocation7 + $0x40] sm:$0xff]
    %v223 = vld [vmem:[#allocation7 + $0x48] sm:$0xff]
    %v224 = vld [vmem:[#allocation7 + $0x50] sm:$0xff]
    %v225 = vld [vmem:[#allocation7 + $0x58] sm:$0xff]
    %v226 = vld [vmem:[#allocation7 + $0x60] sm:$0xff]
    %v227 = vld [vmem:[#allocation7 + $0x68] sm:$0xff]
    %v228 = vld [vmem:[#allocation7 + $0x70] sm:$0xff]
    %v229 = vld [vmem:[#allocation7 + $0x78] sm:$0xff]
    %v246 = vunpack.c.l.b16 %v214
    %v247 = vunpack.c.h.b16 %v214
    %v248 = vunpack.c.l.b16 %v215
    %v249 = vunpack.c.h.b16 %v215
    %v250 = vunpack.c.l.b16 %v216
    %v251 = vunpack.c.h.b16 %v216
    %v252 = vunpack.c.l.b16 %v217
    %v253 = vunpack.c.h.b16 %v217
    %v254 = vunpack.c.l.b16 %v218
    %v255 = vunpack.c.h.b16 %v218
    %v256 = vunpack.c.l.b16 %v219
    %v257 = vunpack.c.h.b16 %v219
    %v258 = vunpack.c.l.b16 %v220
    %v259 = vunpack.c.h.b16 %v220
    %v260 = vunpack.c.l.b16 %v221
    %v261 = vunpack.c.h.b16 %v221
    %v262 = vunpack.c.l.b16 %v222
    %v263 = vunpack.c.h.b16 %v222
    %v264 = vunpack.c.l.b16 %v223
    %v265 = vunpack.c.h.b16 %v223
    %v266 = vunpack.c.l.b16 %v224
    %v267 = vunpack.c.h.b16 %v224
    %v268 = vunpack.c.l.b16 %v225
    %v269 = vunpack.c.h.b16 %v225
    %v270 = vunpack.c.l.b16 %v226
    %v271 = vunpack.c.h.b16 %v226
    %v272 = vunpack.c.l.b16 %v227
    %v273 = vunpack.c.h.b16 %v227
    %v274 = vunpack.c.l.b16 %v228
    %v275 = vunpack.c.h.b16 %v228
    %v276 = vunpack.c.l.b16 %v229
    %v277 = vunpack.c.h.b16 %v229
    %v278 = vpack.c.b16 %v248, %v246
    %v279 = vpack.c.b16 %v249, %v247
    %v280 = vpack.c.b16 %v252, %v250
    %v281 = vpack.c.b16 %v253, %v251
    %v282 = vpack.c.b16 %v256, %v254
    %v283 = vpack.c.b16 %v257, %v255
    %v284 = vpack.c.b16 %v260, %v258
    %v285 = vpack.c.b16 %v261, %v259
    %v286 = vpack.c.b16 %v264, %v262
    %v287 = vpack.c.b16 %v265, %v263
    %v288 = vpack.c.b16 %v268, %v266
    %v289 = vpack.c.b16 %v269, %v267
    %v290 = vpack.c.b16 %v272, %v270
    %v291 = vpack.c.b16 %v273, %v271
    %v292 = vpack.c.b16 %v276, %v274
    %v293 = vpack.c.b16 %v277, %v275
    %310 = vmatpush.bf16.msra.mxu0 %v292
    %311 = vmatpush.bf16.msra.mxu0 %v290
    %312 = vmatpush.bf16.msra.mxu0 %v288
    %313 = vmatpush.bf16.msra.mxu0 %v286
    %314 = vmatpush.bf16.msra.mxu0 %v284
    %315 = vmatpush.bf16.msra.mxu0 %v282
    %316 = vmatpush.bf16.msra.mxu0 %v280
    %317 = vmatpush.bf16.msra.mxu0 %v278
    %318 = vmatmul.bf16.gmra.mxu0 %v211
    %v319 = vpop.f32.mrf.mxu0
    %v320 = vadd.f32 0.0, %v319
    %v321 = vpop.f32.mrf.mxu0
    %v322 = vadd.f32 0.0, %v321
    %323 = vmatmul.bf16.gmra.mxu0 %v212
    %v324 = vpop.f32.mrf.mxu0
    %v325 = vadd.f32 0.0, %v324
    %v326 = vpop.f32.mrf.mxu0
    %v327 = vadd.f32 0.0, %v326
    %328 = vmatmul.bf16.gmra.mxu0 %v213
    %v329 = vpop.f32.mrf.mxu0
    %v330 = vadd.f32 0.0, %v329
    %v331 = vpop.f32.mrf.mxu0
    %v332 = vadd.f32 0.0, %v331
    %333 = vdwg.mxu0
    %334 = vmatpush.bf16.msra.mxu0 %v293
    %335 = vmatpush.bf16.msra.mxu0 %v291
    %336 = vmatpush.bf16.msra.mxu0 %v289
    %337 = vmatpush.bf16.msra.mxu0 %v287
    %338 = vmatpush.bf16.msra.mxu0 %v285
    %339 = vmatpush.bf16.msra.mxu0 %v283
    %340 = vmatpush.bf16.msra.mxu0 %v281
    %341 = vmatpush.bf16.msra.mxu0 %v279
    %342 = vmatmul.bf16.gmra.mxu0 %v211
    %v343 = vpop.f32.mrf.mxu0
    %v344 = vadd.f32 0.0, %v343
    %v345 = vpop.f32.mrf.mxu0
    %v346 = vadd.f32 0.0, %v345
    %347 = vmatmul.bf16.gmra.mxu0 %v212
    %v348 = vpop.f32.mrf.mxu0
    %v349 = vadd.f32 0.0, %v348
    %v350 = vpop.f32.mrf.mxu0
    %v351 = vadd.f32 0.0, %v350
    %352 = vmatmul.bf16.gmra.mxu0 %v213
    %v353 = vpop.f32.mrf.mxu0
    %v354 = vadd.f32 0.0, %v353
    %v355 = vpop.f32.mrf.mxu0
    %v356 = vadd.f32 0.0, %v355
    %357 = vdwg.mxu0
    %v358 = vmul.f32 %v320, %v320
    %v359 = vmul.f32 %v322, %v322
    %v360 = vmul.f32 %v325, %v325
    %v361 = vmul.f32 %v327, %v327
    %v362 = vadd.f32 %v358, %v360
    %v363 = vadd.f32 %v359, %v361
    %v364 = vmul.f32 %v330, %v330
    %v365 = vmul.f32 %v332, %v332
    %v366 = vadd.f32 %v362, %v364
    %v367 = vadd.f32 %v363, %v365
    %v368 = vrsqrt.pop %v366
    %v369 = vmul.f32 %v368, %v366
    %v370 = vmul.f32 %v369, %v368
    %v371 = vmul.f32 0.5, %v370
    %v372 = vsub.f32 1.5, %v371
    %v373 = vmul.f32 %v368, %v372
    %v374 = vmul.f32 %v366, %v373
    %vm375 = vcmp.eq.f32.partialorder %v366, inf
    %v376 = vsel %vm375, %v366, %v374
    %vm377 = vcmp.eq.f32.partialorder %v366, 0.0
    %v378 = vand.u32 %v366, 2147483648
    %v379 = vsel %vm377, %v378, %v376
    %v380 = vrsqrt.pop %v367
    %v381 = vmul.f32 %v380, %v367
    %v382 = vmul.f32 %v381, %v380
    %v383 = vmul.f32 0.5, %v382
    %v384 = vsub.f32 1.5, %v383
    %v385 = vmul.f32 %v380, %v384
    %v386 = vmul.f32 %v367, %v385
    %vm387 = vcmp.eq.f32.partialorder %v367, inf
    %v388 = vsel %vm387, %v367, %v386
    %vm389 = vcmp.eq.f32.partialorder %v367, 0.0
    %v390 = vand.u32 %v367, 2147483648
    %v391 = vsel %vm389, %v390, %v388
    %v392 = vpack.c.bf16 %v391, %v379
    %v393 = vld [vmem:[#allocation8] sm:$0xf]
    %v394 = vld [vmem:[#allocation8 + $0x4] sm:$0xf]
    %v395 = vld [vmem:[#allocation8 + $0x8] sm:$0xf]
    %v396 = vld [vmem:[#allocation8 + $0xc] sm:$0xf]
    %v397 = vld [vmem:[#allocation8 + $0x10] sm:$0xf]
    %v398 = vld [vmem:[#allocation8 + $0x14] sm:$0xf]
    %v399 = vld [vmem:[#allocation8 + $0x18] sm:$0xf]
    %v400 = vld [vmem:[#allocation8 + $0x1c] sm:$0xf]
    %v401 = vld [vmem:[#allocation8 + $0x20] sm:$0xf]
    %v402 = vld [vmem:[#allocation8 + $0x24] sm:$0xf]
    %v403 = vld [vmem:[#allocation8 + $0x28] sm:$0xf]
    %v404 = vld [vmem:[#allocation8 + $0x2c] sm:$0xf]
    %v405 = vld [vmem:[#allocation8 + $0x30] sm:$0xf]
    %v406 = vld [vmem:[#allocation8 + $0x34] sm:$0xf]
    %v407 = vld [vmem:[#allocation8 + $0x38] sm:$0xf]
    %v408 = vld [vmem:[#allocation8 + $0x3c] sm:$0xf]
    %v409 = vpack.c.bf16 %v210, %v209
    %v410 = vld [vmem:[#allocation10] sm:$0xf]
    %v411 = vld [vmem:[#allocation10 + $0x4] sm:$0xf]
    %v412 = vld [vmem:[#allocation10 + $0x8] sm:$0xf]
    %v413 = vld [vmem:[#allocation10 + $0xc] sm:$0xf]
    %v414 = vld [vmem:[#allocation10 + $0x10] sm:$0xf]
    %v415 = vld [vmem:[#allocation10 + $0x14] sm:$0xf]
    %v416 = vld [vmem:[#allocation10 + $0x18] sm:$0xf]
    %v417 = vld [vmem:[#allocation10 + $0x1c] sm:$0xf]
    %v418 = vld [vmem:[#allocation10 + $0x20] sm:$0xf]
    %v419 = vld [vmem:[#allocation10 + $0x24] sm:$0xf]
    %v420 = vld [vmem:[#allocation10 + $0x28] sm:$0xf]
    %v421 = vld [vmem:[#allocation10 + $0x2c] sm:$0xf]
    %v422 = vld [vmem:[#allocation10 + $0x30] sm:$0xf]
    %v423 = vld [vmem:[#allocation10 + $0x34] sm:$0xf]
    %v424 = vld [vmem:[#allocation10 + $0x38] sm:$0xf]
    %v425 = vld [vmem:[#allocation10 + $0x3c] sm:$0xf]
    %v442 = vunpack.c.l.b16 %v410
    %v443 = vunpack.c.l.b16 %v411
    %v444 = vunpack.c.l.b16 %v412
    %v445 = vunpack.c.l.b16 %v413
    %v446 = vunpack.c.l.b16 %v414
    %v447 = vunpack.c.l.b16 %v415
    %v448 = vunpack.c.l.b16 %v416
    %v449 = vunpack.c.l.b16 %v417
    %v450 = vunpack.c.l.b16 %v418
    %v451 = vunpack.c.l.b16 %v419
    %v452 = vunpack.c.l.b16 %v420
    %v453 = vunpack.c.l.b16 %v421
    %v454 = vunpack.c.l.b16 %v422
    %v455 = vunpack.c.l.b16 %v423
    %v456 = vunpack.c.l.b16 %v424
    %v457 = vunpack.c.l.b16 %v425
    %v458 = vpack.c.b16 %v443, %v442
    %v459 = vpack.c.b16 %v445, %v444
    %v460 = vpack.c.b16 %v447, %v446
    %v461 = vpack.c.b16 %v449, %v448
    %v462 = vpack.c.b16 %v451, %v450
    %v463 = vpack.c.b16 %v453, %v452
    %v464 = vpack.c.b16 %v455, %v454
    %v465 = vpack.c.b16 %v457, %v456
    %474 = vmatpush.bf16.msra.mxu0 %v465
    %475 = vmatpush.bf16.msra.mxu0 %v464
    %476 = vmatpush.bf16.msra.mxu0 %v463
    %477 = vmatpush.bf16.msra.mxu0 %v462
    %478 = vmatpush.bf16.msra.mxu0 %v461
    %479 = vmatpush.bf16.msra.mxu0 %v460
    %480 = vmatpush.bf16.msra.mxu0 %v459
    %481 = vmatpush.bf16.msra.mxu0 %v458
    %482 = vmatmul.bf16.gmra.mxu0 %v409
    %v483 = vpop.f32.mrf.mxu0
    %v484 = vadd.f32 0.0, %v483
    %v485 = vpop.f32.mrf.mxu0
    %v486 = vadd.f32 0.0, %v485
    %487 = vdwg.mxu0
    %v504 = vunpack.c.l.b16 %v393
    %v505 = vunpack.c.l.b16 %v394
    %v506 = vunpack.c.l.b16 %v395
    %v507 = vunpack.c.l.b16 %v396
    %v508 = vunpack.c.l.b16 %v397
    %v509 = vunpack.c.l.b16 %v398
    %v510 = vunpack.c.l.b16 %v399
    %v511 = vunpack.c.l.b16 %v400
    %v512 = vunpack.c.l.b16 %v401
    %v513 = vunpack.c.l.b16 %v402
    %v514 = vunpack.c.l.b16 %v403
    %v515 = vunpack.c.l.b16 %v404
    %v516 = vunpack.c.l.b16 %v405
    %v517 = vunpack.c.l.b16 %v406
    %v518 = vunpack.c.l.b16 %v407
    %v519 = vunpack.c.l.b16 %v408
    %v520 = vpack.c.b16 %v505, %v504
    %v521 = vpack.c.b16 %v507, %v506
    %v522 = vpack.c.b16 %v509, %v508
    %v523 = vpack.c.b16 %v511, %v510
    %v524 = vpack.c.b16 %v513, %v512
    %v525 = vpack.c.b16 %v515, %v514
    %v526 = vpack.c.b16 %v517, %v516
    %v527 = vpack.c.b16 %v519, %v518
    %536 = vmatpush.bf16.msra.mxu0 %v527
    %537 = vmatpush.bf16.msra.mxu0 %v526
    %538 = vmatpush.bf16.msra.mxu0 %v525
    %539 = vmatpush.bf16.msra.mxu0 %v524
    %540 = vmatpush.bf16.msra.mxu0 %v523
    %541 = vmatpush.bf16.msra.mxu0 %v522
    %542 = vmatpush.bf16.msra.mxu0 %v521
    %543 = vmatpush.bf16.msra.mxu0 %v520
    %544 = vmatmul.bf16.gmra.mxu0 %v392
    %v545 = vpop.f32.mrf.mxu0
    %v546 = vadd.f32 %v484, %v545
    %v547 = vpop.f32.mrf.mxu0
    %v548 = vadd.f32 %v486, %v547
    %549 = vdwg.mxu0
    %v550 = vld [vmem:[%s5] sm:$0x1]
    %v552 = vperm.slane %v550, 0
    %v554 = vadd.f32 %v546, %v552
    %v555 = vadd.f32 %v548, %v552
    %v556 = vld [vmem:[%s6] sm:$0x1]
    %v557 = vld [vmem:[%s7] sm:$0x1]
    %558 = vadd.xlane.f32.xlu0 %v554
    %v559 = vpop.xlane.xlu0 %558
    %560 = vadd.xlane.f32.xlu0 %v555
    %v561 = vpop.xlane.xlu0 %560
    %v562 = vrcp.pop 128.0
    %v563 = vmul.f32 128.0, %v562
    %v564 = vsub.f32 1.0, %v563
    %v565 = vmul.f32 %v562, %v564
    %v566 = vadd.f32 %v562, %v565
    %vm567 = vweird.f32 %v562
    %v568 = vsel %vm567, %v562, %v566
    %v569 = vmul.f32 %v559, %v568
    %v570 = vmul.f32 %v561, %v568
    %v571 = vsub.f32 %v554, %v569
    %v572 = vsub.f32 %v555, %v570
    %v573 = vmul.f32 %v571, %v571
    %v574 = vmul.f32 %v572, %v572
    %575 = vadd.xlane.f32.xlu0 %v573
    %v576 = vpop.xlane.xlu0 %575
    %577 = vadd.xlane.f32.xlu0 %v574
    %v578 = vpop.xlane.xlu0 %577
    %v579 = vmul.f32 %v576, %v568
    %v580 = vmul.f32 %v578, %v568
    %v581 = vadd.f32 %v579, 1e-05
    %v582 = vadd.f32 %v580, 1e-05
    %v583 = vrsqrt.pop %v581
    %v584 = vmul.f32 %v583, %v581
    %v585 = vmul.f32 %v584, %v583
    %v586 = vmul.f32 0.5, %v585
    %v587 = vsub.f32 1.5, %v586
    %v588 = vmul.f32 %v583, %v587
    %vm589 = vweird.f32 %v581
    %vm590 = vweird.f32 %v583
    %vm591 = vmor %vm589, %vm590
    %v592 = vsel %vm591, %v583, %v588
    %v593 = vrsqrt.pop %v582
    %v594 = vmul.f32 %v593, %v582
    %v595 = vmul.f32 %v594, %v593
    %v596 = vmul.f32 0.5, %v595
    %v597 = vsub.f32 1.5, %v596
    %v598 = vmul.f32 %v593, %v597
    %vm599 = vweird.f32 %v582
    %vm600 = vweird.f32 %v593
    %vm601 = vmor %vm599, %vm600
    %v602 = vsel %vm601, %v593, %v598
    %v603 = vmul.f32 %v571, %v592
    %v604 = vmul.f32 %v572, %v602
    %v606 = vperm.slane %v556, 0
    %v608 = vmul.f32 %v603, %v606
    %v609 = vmul.f32 %v604, %v606
    %v611 = vperm.slane %v557, 0
    %v613 = vadd.f32 %v608, %v611
    %v614 = vadd.f32 %v609, %v611
    %v615 = vxor.u32 %v613, 2147483648
    %v616 = vxor.u32 %v614, 2147483648
    %v617 = vmul.f32 %v615, 1.442695
    %v618 = vpow.pop %v617
    %v619 = vmul.f32 %v616, 1.442695
    %v620 = vpow.pop %v619
    %v621 = vadd.f32 %v618, 1.0
    %v622 = vadd.f32 %v620, 1.0
    %v623 = vrcp.pop %v621
    %v624 = vmul.f32 %v621, %v623
    %v625 = vsub.f32 1.0, %v624
    %v626 = vmul.f32 %v623, %v625
    %v627 = vadd.f32 %v623, %v626
    %vm628 = vweird.f32 %v621
    %vm629 = vweird.f32 %v623
    %vm630 = vmor %vm628, %vm629
    %v631 = vsel %vm630, %v623, %v627
    %v632 = vand.u32 2147483647, %v621
    %vm633 = vcmp.eq.f32.partialorder %v632, 8.507059e+37
    %v634 = vand.u32 %v621, 2147483648
    %v635 = vor.u32 1.1754944e-38, %v634
    %v636 = vsel %vm633, %v635, %v631
    %v637 = vmul.f32 1.0, %v636
    %v638 = vrcp.pop %v622
    %v639 = vmul.f32 %v622, %v638
    %v640 = vsub.f32 1.0, %v639
    %v641 = vmul.f32 %v638, %v640
    %v642 = vadd.f32 %v638, %v641
    %vm643 = vweird.f32 %v622
    %vm644 = vweird.f32 %v638
    %vm645 = vmor %vm643, %vm644
    %v646 = vsel %vm645, %v638, %v642
    %v647 = vand.u32 2147483647, %v622
    %vm648 = vcmp.eq.f32.partialorder %v647, 8.507059e+37
    %v649 = vand.u32 %v622, 2147483648
    %v650 = vor.u32 1.1754944e-38, %v649
    %v651 = vsel %vm648, %v650, %v646
    %v652 = vmul.f32 1.0, %v651
    %v653 = vmul.f32 %v613, %v637
    %v654 = vmul.f32 %v614, %v652
    %v655 = vpack.c.bf16 %v654, %v653
    %v656 = vld [vmem:[#allocation11] sm:$0xf]
    %v657 = vld [vmem:[#allocation11 + $0x4] sm:$0xf]
    %v658 = vld [vmem:[#allocation11 + $0x8] sm:$0xf]
    %v659 = vld [vmem:[#allocation11 + $0xc] sm:$0xf]
    %v660 = vld [vmem:[#allocation11 + $0x10] sm:$0xf]
    %v661 = vld [vmem:[#allocation11 + $0x14] sm:$0xf]
    %v662 = vld [vmem:[#allocation11 + $0x18] sm:$0xf]
    %v663 = vld [vmem:[#allocation11 + $0x1c] sm:$0xf]
    %v664 = vld [vmem:[#allocation11 + $0x20] sm:$0xf]
    %v665 = vld [vmem:[#allocation11 + $0x24] sm:$0xf]
    %v666 = vld [vmem:[#allocation11 + $0x28] sm:$0xf]
    %v667 = vld [vmem:[#allocation11 + $0x2c] sm:$0xf]
    %v668 = vld [vmem:[#allocation11 + $0x30] sm:$0xf]
    %v669 = vld [vmem:[#allocation11 + $0x34] sm:$0xf]
    %v670 = vld [vmem:[#allocation11 + $0x38] sm:$0xf]
    %v671 = vld [vmem:[#allocation11 + $0x3c] sm:$0xf]
    %v672 = vld [vmem:[%s9] sm:$0x1]
    %v674 = vperm.slane %v672, 0
    %v692 = vunpack.c.l.b16 %v656
    %v693 = vunpack.c.l.b16 %v657
    %v694 = vunpack.c.l.b16 %v658
    %v695 = vunpack.c.l.b16 %v659
    %v696 = vunpack.c.l.b16 %v660
    %v697 = vunpack.c.l.b16 %v661
    %v698 = vunpack.c.l.b16 %v662
    %v699 = vunpack.c.l.b16 %v663
    %v700 = vunpack.c.l.b16 %v664
    %v701 = vunpack.c.l.b16 %v665
    %v702 = vunpack.c.l.b16 %v666
    %v703 = vunpack.c.l.b16 %v667
    %v704 = vunpack.c.l.b16 %v668
    %v705 = vunpack.c.l.b16 %v669
    %v706 = vunpack.c.l.b16 %v670
    %v707 = vunpack.c.l.b16 %v671
    %v708 = vpack.c.b16 %v693, %v692
    %v709 = vpack.c.b16 %v695, %v694
    %v710 = vpack.c.b16 %v697, %v696
    %v711 = vpack.c.b16 %v699, %v698
    %v712 = vpack.c.b16 %v701, %v700
    %v713 = vpack.c.b16 %v703, %v702
    %v714 = vpack.c.b16 %v705, %v704
    %v715 = vpack.c.b16 %v707, %v706
    %724 = vmatpush.bf16.msra.mxu0 %v715
    %725 = vmatpush.bf16.msra.mxu0 %v714
    %726 = vmatpush.bf16.msra.mxu0 %v713
    %727 = vmatpush.bf16.msra.mxu0 %v712
    %728 = vmatpush.bf16.msra.mxu0 %v711
    %729 = vmatpush.bf16.msra.mxu0 %v710
    %730 = vmatpush.bf16.msra.mxu0 %v709
    %731 = vmatpush.bf16.msra.mxu0 %v708
    %732 = vmatmul.bf16.gmra.mxu0 %v655
    %v733 = vpop.f32.mrf.mxu0
    %v734 = vadd.f32 %v674, %v733
    %v735 = vpop.f32.mrf.mxu0
    %v736 = vadd.f32 %v674, %v735
    %737 = vdwg.mxu0
    %v738 = vld [vmem:[%s10] sm:$0x1]
    %v739 = vld [vmem:[%s11] sm:$0x1]
    %740 = vadd.xlane.f32.xlu0 %v734
    %v741 = vpop.xlane.xlu0 %740
    %742 = vadd.xlane.f32.xlu0 %v736
    %v743 = vpop.xlane.xlu0 %742
    %v744 = vmul.f32 %v741, %v568
    %v745 = vmul.f32 %v743, %v568
    %v746 = vsub.f32 %v734, %v744
    %v747 = vsub.f32 %v736, %v745
    %v748 = vmul.f32 %v746, %v746
    %v749 = vmul.f32 %v747, %v747
    %750 = vadd.xlane.f32.xlu0 %v748
    %v751 = vpop.xlane.xlu0 %750
    %752 = vadd.xlane.f32.xlu0 %v749
    %v753 = vpop.xlane.xlu0 %752
    %v754 = vmul.f32 %v751, %v568
    %v755 = vmul.f32 %v753, %v568
    %v756 = vadd.f32 %v754, 1e-05
    %v757 = vadd.f32 %v755, 1e-05
    %v758 = vrsqrt.pop %v756
    %v759 = vmul.f32 %v758, %v756
    %v760 = vmul.f32 %v759, %v758
    %v761 = vmul.f32 0.5, %v760
    %v762 = vsub.f32 1.5, %v761
    %v763 = vmul.f32 %v758, %v762
    %vm764 = vweird.f32 %v756
    %vm765 = vweird.f32 %v758
    %vm766 = vmor %vm764, %vm765
    %v767 = vsel %vm766, %v758, %v763
    %v768 = vrsqrt.pop %v757
    %v769 = vmul.f32 %v768, %v757
    %v770 = vmul.f32 %v769, %v768
    %v771 = vmul.f32 0.5, %v770
    %v772 = vsub.f32 1.5, %v771
    %v773 = vmul.f32 %v768, %v772
    %vm774 = vweird.f32 %v757
    %vm775 = vweird.f32 %v768
    %vm776 = vmor %vm774, %vm775
    %v777 = vsel %vm776, %v768, %v773
    %v778 = vmul.f32 %v746, %v767
    %v779 = vmul.f32 %v747, %v777
    %v781 = vperm.slane %v738, 0
    %v783 = vmul.f32 %v778, %v781
    %v784 = vmul.f32 %v779, %v781
    %v786 = vperm.slane %v739, 0
    %v788 = vadd.f32 %v783, %v786
    %v789 = vadd.f32 %v784, %v786
    %v790 = vxor.u32 %v788, 2147483648
    %v791 = vxor.u32 %v789, 2147483648
    %v792 = vmul.f32 %v790, 1.442695
    %v793 = vpow.pop %v792
    %v794 = vmul.f32 %v791, 1.442695
    %v795 = vpow.pop %v794
    %v796 = vadd.f32 %v793, 1.0
    %v797 = vadd.f32 %v795, 1.0
    %v798 = vrcp.pop %v796
    %v799 = vmul.f32 %v796, %v798
    %v800 = vsub.f32 1.0, %v799
    %v801 = vmul.f32 %v798, %v800
    %v802 = vadd.f32 %v798, %v801
    %vm803 = vweird.f32 %v796
    %vm804 = vweird.f32 %v798
    %vm805 = vmor %vm803, %vm804
    %v806 = vsel %vm805, %v798, %v802
    %v807 = vand.u32 2147483647, %v796
    %vm808 = vcmp.eq.f32.partialorder %v807, 8.507059e+37
    %v809 = vand.u32 %v796, 2147483648
    %v810 = vor.u32 1.1754944e-38, %v809
    %v811 = vsel %vm808, %v810, %v806
    %v812 = vmul.f32 1.0, %v811
    %v813 = vrcp.pop %v797
    %v814 = vmul.f32 %v797, %v813
    %v815 = vsub.f32 1.0, %v814
    %v816 = vmul.f32 %v813, %v815
    %v817 = vadd.f32 %v813, %v816
    %vm818 = vweird.f32 %v797
    %vm819 = vweird.f32 %v813
    %vm820 = vmor %vm818, %vm819
    %v821 = vsel %vm820, %v813, %v817
    %v822 = vand.u32 2147483647, %v797
    %vm823 = vcmp.eq.f32.partialorder %v822, 8.507059e+37
    %v824 = vand.u32 %v797, 2147483648
    %v825 = vor.u32 1.1754944e-38, %v824
    %v826 = vsel %vm823, %v825, %v821
    %v827 = vmul.f32 1.0, %v826
    %v828 = vmul.f32 %v788, %v812
    %v829 = vmul.f32 %v789, %v827
    %v830 = vpack.c.bf16 %v829, %v828
    %v831 = vld [vmem:[#allocation13] sm:$0xf]
    %v832 = vld [vmem:[#allocation13 + $0x4] sm:$0xf]
    %v833 = vld [vmem:[#allocation13 + $0x8] sm:$0xf]
    %v834 = vld [vmem:[#allocation13 + $0xc] sm:$0xf]
    %v835 = vld [vmem:[#allocation13 + $0x10] sm:$0xf]
    %v836 = vld [vmem:[#allocation13 + $0x14] sm:$0xf]
    %v837 = vld [vmem:[#allocation13 + $0x18] sm:$0xf]
    %v838 = vld [vmem:[#allocation13 + $0x1c] sm:$0xf]
    %v839 = vld [vmem:[#allocation13 + $0x20] sm:$0xf]
    %v840 = vld [vmem:[#allocation13 + $0x24] sm:$0xf]
    %v841 = vld [vmem:[#allocation13 + $0x28] sm:$0xf]
    %v842 = vld [vmem:[#allocation13 + $0x2c] sm:$0xf]
    %v843 = vld [vmem:[#allocation13 + $0x30] sm:$0xf]
    %v844 = vld [vmem:[#allocation13 + $0x34] sm:$0xf]
    %v845 = vld [vmem:[#allocation13 + $0x38] sm:$0xf]
    %v846 = vld [vmem:[#allocation13 + $0x3c] sm:$0xf]
    %v847 = vld [vmem:[%s15] sm:$0x1]
    %v849 = vperm.slane %v847, 0
    %v867 = vunpack.c.l.b16 %v831
    %v868 = vunpack.c.l.b16 %v832
    %v869 = vunpack.c.l.b16 %v833
    %v870 = vunpack.c.l.b16 %v834
    %v871 = vunpack.c.l.b16 %v835
    %v872 = vunpack.c.l.b16 %v836
    %v873 = vunpack.c.l.b16 %v837
    %v874 = vunpack.c.l.b16 %v838
    %v875 = vunpack.c.l.b16 %v839
    %v876 = vunpack.c.l.b16 %v840
    %v877 = vunpack.c.l.b16 %v841
    %v878 = vunpack.c.l.b16 %v842
    %v879 = vunpack.c.l.b16 %v843
    %v880 = vunpack.c.l.b16 %v844
    %v881 = vunpack.c.l.b16 %v845
    %v882 = vunpack.c.l.b16 %v846
    %v883 = vpack.c.b16 %v868, %v867
    %v884 = vpack.c.b16 %v870, %v869
    %v885 = vpack.c.b16 %v872, %v871
    %v886 = vpack.c.b16 %v874, %v873
    %v887 = vpack.c.b16 %v876, %v875
    %v888 = vpack.c.b16 %v878, %v877
    %v889 = vpack.c.b16 %v880, %v879
    %v890 = vpack.c.b16 %v882, %v881
    %899 = vmatpush.bf16.msra.mxu0 %v890
    %900 = vmatpush.bf16.msra.mxu0 %v889
    %901 = vmatpush.bf16.msra.mxu0 %v888
    %902 = vmatpush.bf16.msra.mxu0 %v887
    %903 = vmatpush.bf16.msra.mxu0 %v886
    %904 = vmatpush.bf16.msra.mxu0 %v885
    %905 = vmatpush.bf16.msra.mxu0 %v884
    %906 = vmatpush.bf16.msra.mxu0 %v883
    %907 = vmatmul.bf16.gmra.mxu0 %v830
    %v908 = vpop.f32.mrf.mxu0
    %v909 = vadd.f32 %v849, %v908
    %v910 = vpop.f32.mrf.mxu0
    %v911 = vadd.f32 %v849, %v910
    %912 = vdwg.mxu0
    %v913 = vld [vmem:[#allocation14] sm:$0xf]
    %v914 = vld [vmem:[#allocation14 + $0x4] sm:$0xf]
    %v915 = vld [vmem:[#allocation14 + $0x8] sm:$0xf]
    %v916 = vld [vmem:[#allocation14 + $0xc] sm:$0xf]
    %v917 = vld [vmem:[#allocation14 + $0x10] sm:$0xf]
    %v918 = vld [vmem:[#allocation14 + $0x14] sm:$0xf]
    %v919 = vld [vmem:[#allocation14 + $0x18] sm:$0xf]
    %v920 = vld [vmem:[#allocation14 + $0x1c] sm:$0xf]
    %v921 = vld [vmem:[#allocation14 + $0x20] sm:$0xf]
    %v922 = vld [vmem:[#allocation14 + $0x24] sm:$0xf]
    %v923 = vld [vmem:[#allocation14 + $0x28] sm:$0xf]
    %v924 = vld [vmem:[#allocation14 + $0x2c] sm:$0xf]
    %v925 = vld [vmem:[#allocation14 + $0x30] sm:$0xf]
    %v926 = vld [vmem:[#allocation14 + $0x34] sm:$0xf]
    %v927 = vld [vmem:[#allocation14 + $0x38] sm:$0xf]
    %v928 = vld [vmem:[#allocation14 + $0x3c] sm:$0xf]
    %v929 = vld [vmem:[%s16] sm:$0x1]
    %v931 = vperm.slane %v929, 0
    %v949 = vunpack.c.l.b16 %v913
    %v950 = vunpack.c.l.b16 %v914
    %v951 = vunpack.c.l.b16 %v915
    %v952 = vunpack.c.l.b16 %v916
    %v953 = vunpack.c.l.b16 %v917
    %v954 = vunpack.c.l.b16 %v918
    %v955 = vunpack.c.l.b16 %v919
    %v956 = vunpack.c.l.b16 %v920
    %v957 = vunpack.c.l.b16 %v921
    %v958 = vunpack.c.l.b16 %v922
    %v959 = vunpack.c.l.b16 %v923
    %v960 = vunpack.c.l.b16 %v924
    %v961 = vunpack.c.l.b16 %v925
    %v962 = vunpack.c.l.b16 %v926
    %v963 = vunpack.c.l.b16 %v927
    %v964 = vunpack.c.l.b16 %v928
    %v965 = vpack.c.b16 %v950, %v949
    %v966 = vpack.c.b16 %v952, %v951
    %v967 = vpack.c.b16 %v954, %v953
    %v968 = vpack.c.b16 %v956, %v955
    %v969 = vpack.c.b16 %v958, %v957
    %v970 = vpack.c.b16 %v960, %v959
    %v971 = vpack.c.b16 %v962, %v961
    %v972 = vpack.c.b16 %v964, %v963
    %981 = vmatpush.bf16.msra.mxu0 %v972
    %982 = vmatpush.bf16.msra.mxu0 %v971
    %983 = vmatpush.bf16.msra.mxu0 %v970
    %984 = vmatpush.bf16.msra.mxu0 %v969
    %985 = vmatpush.bf16.msra.mxu0 %v968
    %986 = vmatpush.bf16.msra.mxu0 %v967
    %987 = vmatpush.bf16.msra.mxu0 %v966
    %988 = vmatpush.bf16.msra.mxu0 %v965
    %989 = vmatmul.bf16.gmra.mxu0 %v830
    %v990 = vpop.f32.mrf.mxu0
    %v991 = vadd.f32 %v931, %v990
    %v992 = vpop.f32.mrf.mxu0
    %v993 = vadd.f32 %v931, %v992
    %994 = vdwg.mxu0
    %v995 = vld [vmem:[#allocation16] sm:$0xf]
    %v996 = vld [vmem:[#allocation16 + $0x4] sm:$0xf]
    %v997 = vld [vmem:[#allocation16 + $0x8] sm:$0xf]
    %v998 = vld [vmem:[#allocation16 + $0xc] sm:$0xf]
    %v999 = vld [vmem:[#allocation16 + $0x10] sm:$0xf]
    %v1000 = vld [vmem:[#allocation16 + $0x14] sm:$0xf]
    %v1001 = vld [vmem:[#allocation16 + $0x18] sm:$0xf]
    %v1002 = vld [vmem:[#allocation16 + $0x1c] sm:$0xf]
    %v1003 = vld [vmem:[#allocation16 + $0x20] sm:$0xf]
    %v1004 = vld [vmem:[#allocation16 + $0x24] sm:$0xf]
    %v1005 = vld [vmem:[#allocation16 + $0x28] sm:$0xf]
    %v1006 = vld [vmem:[#allocation16 + $0x2c] sm:$0xf]
    %v1007 = vld [vmem:[#allocation16 + $0x30] sm:$0xf]
    %v1008 = vld [vmem:[#allocation16 + $0x34] sm:$0xf]
    %v1009 = vld [vmem:[#allocation16 + $0x38] sm:$0xf]
    %v1010 = vld [vmem:[#allocation16 + $0x3c] sm:$0xf]
    %v1011 = vld [vmem:[%s17] sm:$0x1]
    %v1013 = vperm.slane %v1011, 0
    %v1031 = vunpack.c.l.b16 %v995
    %v1032 = vunpack.c.l.b16 %v996
    %v1033 = vunpack.c.l.b16 %v997
    %v1034 = vunpack.c.l.b16 %v998
    %v1035 = vunpack.c.l.b16 %v999
    %v1036 = vunpack.c.l.b16 %v1000
    %v1037 = vunpack.c.l.b16 %v1001
    %v1038 = vunpack.c.l.b16 %v1002
    %v1039 = vunpack.c.l.b16 %v1003
    %v1040 = vunpack.c.l.b16 %v1004
    %v1041 = vunpack.c.l.b16 %v1005
    %v1042 = vunpack.c.l.b16 %v1006
    %v1043 = vunpack.c.l.b16 %v1007
    %v1044 = vunpack.c.l.b16 %v1008
    %v1045 = vunpack.c.l.b16 %v1009
    %v1046 = vunpack.c.l.b16 %v1010
    %v1047 = vpack.c.b16 %v1032, %v1031
    %v1048 = vpack.c.b16 %v1034, %v1033
    %v1049 = vpack.c.b16 %v1036, %v1035
    %v1050 = vpack.c.b16 %v1038, %v1037
    %v1051 = vpack.c.b16 %v1040, %v1039
    %v1052 = vpack.c.b16 %v1042, %v1041
    %v1053 = vpack.c.b16 %v1044, %v1043
    %v1054 = vpack.c.b16 %v1046, %v1045
    %1063 = vmatpush.bf16.msra.mxu0 %v1054
    %1064 = vmatpush.bf16.msra.mxu0 %v1053
    %1065 = vmatpush.bf16.msra.mxu0 %v1052
    %1066 = vmatpush.bf16.msra.mxu0 %v1051
    %1067 = vmatpush.bf16.msra.mxu0 %v1050
    %1068 = vmatpush.bf16.msra.mxu0 %v1049
    %1069 = vmatpush.bf16.msra.mxu0 %v1048
    %1070 = vmatpush.bf16.msra.mxu0 %v1047
    %1071 = vmatmul.bf16.gmra.mxu0 %v830
    %v1072 = vpop.f32.mrf.mxu0
    %v1073 = vadd.f32 %v1013, %v1072
    %v1074 = vpop.f32.mrf.mxu0
    %v1075 = vadd.f32 %v1013, %v1074
    %1076 = vdwg.mxu0
    %v1077 = vmul.f32 %v366, %v991
    %v1078 = vmul.f32 %v367, %v993
    %v1079 = vadd.f32 %v209, %v1077
    %v1080 = vadd.f32 %v210, %v1078
    %v1081 = vadd.f32 %v1079, %v1073
    %v1082 = vadd.f32 %v1080, %v1075
    %1083 = vst [vmem:[#allocation18] sm:$0xff] %v1081
    %1084 = vst [vmem:[#allocation18 + $0x8] sm:$0xff] %v1082
    %v1085 = vmul.f32 %v344, %v909
    %v1086 = vmul.f32 %v346, %v911
    %v1087 = vadd.f32 %v203, %v1085
    %v1088 = vadd.f32 %v204, %v1086
    %1089 = vst [vmem:[#allocation17] sm:$0xff] %v1087
    %1090 = vst [vmem:[#allocation17 + $0x8] sm:$0xff] %v1088
    %v1091 = vmul.f32 %v349, %v909
    %v1092 = vmul.f32 %v351, %v911
    %v1093 = vadd.f32 %v205, %v1091
    %v1094 = vadd.f32 %v206, %v1092
    %s1095 = scalar_lea.vmem [#allocation17], 16
    %1096 = vst [vmem:[%s1095] sm:$0xff] %v1093
    %1097 = vst [vmem:[%s1095 + $0x8] sm:$0xff] %v1094
    %v1098 = vmul.f32 %v354, %v909
    %v1099 = vmul.f32 %v356, %v911
    %v1100 = vadd.f32 %v207, %v1098
    %v1101 = vadd.f32 %v208, %v1099
    %s1102 = scalar_lea.vmem [#allocation17], 32
    %1103 = vst [vmem:[%s1102] sm:$0xff] %v1100
    %1104 = vst [vmem:[%s1102 + $0x8] sm:$0xff] %v1101
    // Predicated region
    $region110: #{tpu_custom_call.1} parent=1 // pred_check
      _
    $region111: #{tpu_custom_call.1} parent=1 // pred_check_branch
      %1106 = sbr.rel (0) target = $region113
    $region112: #{tpu_custom_call.1} parent=1 // pred_region
      %1108 = vsyncadd [#allocation4], 0
      %s1109 = sshll.u32 [#allocation17], 4
      %s1110 = int_to_ptr.vmem [resolvable:$true] %s1109
      %s1111 = sshll.u32 %s18, 4
      %s1112 = int_to_ptr.hbm [resolvable:$true] %s1111
      %1117 = dma.vmem_to_hbm [thread:$0]  %s1110, 768, %s1112, [#allocation4], 128, 128, 8
    $region113: #{tpu_custom_call.1} parent=1 // pred_fallthru
      _
    // Predicated region
    $region114: #{tpu_custom_call.1} parent=1 // pred_check
      _
    $region115: #{tpu_custom_call.1} parent=1 // pred_check_branch
      %1119 = sbr.rel (0) target = $region117
    $region116: #{tpu_custom_call.1} parent=1 // pred_region
      %1121 = vsyncadd [#allocation19], 0
      %s1122 = sshll.u32 [#allocation18], 4
      %s1123 = int_to_ptr.vmem [resolvable:$true] %s1122
      %s1124 = sshll.u32 %s19, 4
      %s1125 = int_to_ptr.hbm [resolvable:$true] %s1124
      %1130 = dma.vmem_to_hbm [thread:$0]  %s1123, 256, %s1125, [#allocation19], 128, 128, 8
    $region117: #{tpu_custom_call.1} parent=1 // pred_fallthru
      _
    // Predicated region
    $region118: #{tpu_custom_call.1} parent=1 // pred_check
      _
    $region119: #{tpu_custom_call.1} parent=1 // pred_check_branch
      %1132 = sbr.rel (0) target = $region121
    $region120: #{tpu_custom_call.1} parent=1 // pred_region
      %1134 = dma.done [#allocation4], 768
    $region121: #{tpu_custom_call.1} parent=1 // pred_fallthru
      _
    // Predicated region
    $region122: #{tpu_custom_call.1} parent=1 // pred_check
      _
    $region123: #{tpu_custom_call.1} parent=1 // pred_check_branch
      %1136 = sbr.rel (0) target = $region125
    $region124: #{tpu_custom_call.1} parent=1 // pred_region
      %1138 = dma.done [#allocation19], 256
    $region125: #{tpu_custom_call.1} parent=1 // pred_fallthru
      _
    %1139 = vsyncpa [#allocation3], 1
    %1140 = vsyncpa [#allocation6], 1
    %1141 = vsyncpa [#allocation9], 1
    %1142 = vsyncpa [#allocation12], 1
    %1143 = vsyncpa [#allocation15], 1
    %1144 = vsyncpa [#allocation4], 1
    %1145 = vsyncpa [#allocation19], 1

</llo_original>
